<compile_context>
chip_gen: v5e
topology: v5e:2x2
jax: 0.10.0
libtpu: 0.0.40
codegen_flags: <defaults>
</compile_context>

<pallas_src>
import jax
import jax.numpy as jnp
from jax.experimental import pallas as pl
from jax.experimental.pallas import tpu as pltpu

HIDDEN = 256


def _make_critic_kernel(bf16_relu):
    """Builds the kernel body; bf16_relu selects the v6e/v7x bf16 intermediate."""

    def critic_flat_kernel(
        state_ref, action_ref,
        ws_ref, wa_ref, b14_ref,
        w2_ref, b2_ref, w5_ref, b5_ref,
        w3_ref, w6_ref, b36_ref,
        out_ref,
    ):
        s = state_ref[...]          # f32 (TB, state_dim)
        a = action_ref[...]         # f32 (TB, action_dim)

        # Fused first layer of both towers: (TB, 2*HIDDEN), f32 weights (tiny K).
        h = (jnp.dot(s, ws_ref[...], preferred_element_type=jnp.float32)
             + jnp.dot(a, wa_ref[...], preferred_element_type=jnp.float32)
             + b14_ref[...])

        if bf16_relu:
            # bf16-capable VPU: halve the live (TB, 512) intermediate.
            h = jnp.maximum(h.astype(jnp.bfloat16), 0.0)
            h1 = h[:, :HIDDEN]
            h2 = h[:, HIDDEN:]
        else:
            # v5e path: no bf16 VALU — keep ReLU in f32, cast only for the MXU.
            h = jnp.maximum(h, 0.0)
            h1 = h[:, :HIDDEN].astype(jnp.bfloat16)
            h2 = h[:, HIDDEN:].astype(jnp.bfloat16)

        # Second layers: 256x256 bf16 MXU matmuls, f32 accumulation.
        h1 = jnp.maximum(
            jnp.dot(h1, w2_ref[...], preferred_element_type=jnp.float32)
            + b2_ref[...], 0.0)
        h2 = jnp.maximum(
            jnp.dot(h2, w5_ref[...], preferred_element_type=jnp.float32)
            + b5_ref[...], 0.0)

        # Output heads: VPU multiply + lane reduce (keeps N=1 work off the MXU).
        q1 = jnp.sum(h1 * w3_ref[...], axis=-1, keepdims=True)   # (TB, 1)
        q2 = jnp.sum(h2 * w6_ref[...], axis=-1, keepdims=True)   # (TB, 1)

        # Pack both heads into one (TB, 2) output tile.
        col = jax.lax.broadcasted_iota(jnp.int32, out_ref.shape, 1)
        out = jnp.where(col == 0, q1, q2) + b36_ref[...]
        out_ref[...] = out.astype(out_ref.dtype)

    return critic_flat_kernel


def _round_up(x, m):
    return ((x + m - 1) // m) * m


def _device_kind():
    try:
        return jax.devices()[0].device_kind.lower()
    except Exception:
        return ""


def _choose_batch_tile(B, block_b, n_cores):
    if B <= 8:
        return B                                   # single full-extent block
    tb = min(block_b, _round_up(B, 8))
    if n_cores > 1:
        # Ensure the "parallel" batch axis yields >= n_cores tiles (megacore).
        per_core = max(8, _round_up(pl.cdiv(B, n_cores), 8))
        tb = min(tb, per_core)
    return tb


def critic_flat_forward_packed(state, action, params, *, block_b=1024):
    """Returns a packed (B, 2) f32 array: column 0 = q1, column 1 = q2."""
    ws, wa, b14, w2, b2, w5, b5, w3v, w6v, b36 = params
    B, state_dim = state.shape
    action_dim = action.shape[1]

    kind = _device_kind()
    bf16_relu = not any(g in kind for g in ("v2", "v3", "v4", "v5"))
    n_cores = 2 if "v7" in kind else 1

    TB = _choose_batch_tile(B, block_b, n_cores)
    grid_b = pl.cdiv(B, TB)

    kernel = _make_critic_kernel(bf16_relu)
    weights = (ws, wa, b14, w2, b2, w5, b5, w3v, w6v, b36)

    weight_bytes = sum(int(p.size) * p.dtype.itemsize for p in weights)
    cost = pl.CostEstimate(
        flops=int(2 * B * ((state_dim + action_dim) * 2 * HIDDEN
                           + 2 * HIDDEN * HIDDEN
                           + 2 * HIDDEN)),
        transcendentals=0,
        bytes_accessed=int(weight_bytes
                           + B * (state_dim + action_dim) * state.dtype.itemsize
                           + B * 2 * 4),
    )

    def build_and_call(single_buffer_weights):
        def batch_spec(dim):
            return pl.BlockSpec((TB, dim), lambda i: (i, 0))

        def resident(arr):
            if single_buffer_weights:
                # Block index never changes -> drop the dead second buffer.
                return pl.BlockSpec(arr.shape, lambda i: (0, 0),
                                    pipeline_mode=pl.Buffered(1))
            return pl.BlockSpec(arr.shape, lambda i: (0, 0))

        return pl.pallas_call(
            kernel,
            out_shape=jax.ShapeDtypeStruct((B, 2), jnp.float32),
            grid=(grid_b,),
            in_specs=[
                batch_spec(state_dim),
                batch_spec(action_dim),
                resident(ws), resident(wa), resident(b14),
                resident(w2), resident(b2),
                resident(w5), resident(b5),
                resident(w3v), resident(w6v), resident(b36),
            ],
            out_specs=pl.BlockSpec((TB, 2), lambda i: (i, 0)),
            compiler_params=pltpu.CompilerParams(
                dimension_semantics=("parallel",),
                vmem_limit_bytes=64 * 1024 * 1024),
            cost_estimate=cost,
        )(state, action, *weights)

    try:
        return build_and_call(single_buffer_weights=True)
    except Exception:
        # Older pallas builds may reject pipeline_mode=pl.Buffered(1); fall back
        # to the default double-buffered resident weights (correctness-neutral).
        return build_and_call(single_buffer_weights=False)


def critic_flat_forward(state, action, params, *, block_b=1024):
    """Returns (q1, q2), each (B, 1) f32, matching Critic_flat.forward."""
    out = critic_flat_forward_packed(state, action, params, block_b=block_b)
    return out[:, 0:1], out[:, 1:2]


def init_raw_params(key, state_dim, action_dim, hidden=HIDDEN):
    """nn.Linear-style U(-1/sqrt(fan_in), 1/sqrt(fan_in)) init, f32.

    Weights are (in_features, out_features); biases are (1, out_features).
    """
    in_dim = state_dim + action_dim
    dims = [
        (in_dim, hidden),   # l1
        (hidden, hidden),   # l2
        (hidden, 1),        # l3
        (in_dim, hidden),   # l4
        (hidden, hidden),   # l5
        (hidden, 1),        # l6
    ]
    params = []
    for fan_in, fan_out in dims:
        key, kw, kb = jax.random.split(key, 3)
        bound = 1.0 / float(fan_in) ** 0.5
        w = jax.random.uniform(kw, (fan_in, fan_out), jnp.float32, -bound, bound)
        b = jax.random.uniform(kb, (1, fan_out), jnp.float32, -bound, bound)
        params.extend([w, b])
    return params


def fuse_params(raw, state_dim):
    """Build the fused / pre-split kernel parameters from raw f32 ones."""
    w1, b1, w2, b2, w3, b3, w4, b4, w5, b5, w6, b6 = raw
    w14 = jnp.concatenate([w1, w4], axis=1)                 # (in_dim, 512) f32
    ws = w14[:state_dim]                                    # (state_dim, 512) f32 (tiny K)
    wa = w14[state_dim:]                                    # (action_dim, 512) f32
    b14 = jnp.concatenate([b1, b4], axis=1)                 # (1, 512) f32
    w3v = w3.reshape(1, -1)                                 # (1, 256) f32 (VPU head)
    w6v = w6.reshape(1, -1)                                 # (1, 256) f32
    b36 = jnp.concatenate([b3, b6], axis=1)                 # (1, 2) f32
    return (ws, wa, b14,
            w2.astype(jnp.bfloat16), b2,
            w5.astype(jnp.bfloat16), b5,
            w3v, w6v, b36)


if __name__ == "__main__":
    key = jax.random.PRNGKey(0)
    state_dim, action_dim, batch = 16, 4, 8

    k_state, k_action, k_params = jax.random.split(key, 3)
    state = jax.random.normal(k_state, (batch, state_dim), jnp.float32)
    action = jax.random.normal(k_action, (batch, action_dim), jnp.float32)

    raw = init_raw_params(k_params, state_dim, action_dim)
    params = fuse_params(raw, state_dim)

    q1, q2 = critic_flat_forward(state, action, params)
    jax.block_until_ready((q1, q2))
    assert q1.shape == (batch, 1) and q2.shape == (batch, 1)

    # Pure-JAX f32 reference of the original module's math (loose tolerance
    # because the second-layer weights/activations are bf16 on the MXU path).
    w1, b1, w2, b2, w3, b3, w4, b4, w5, b5, w6, b6 = raw
    sa = jnp.concatenate([state, action], axis=1)
    r1 = jnp.maximum(sa @ w1 + b1, 0.0)
    r1 = jnp.maximum(r1 @ w2 + b2, 0.0)
    r1 = r1 @ w3 + b3
    r2 = jnp.maximum(sa @ w4 + b4, 0.0)
    r2 = jnp.maximum(r2 @ w5 + b5, 0.0)
    r2 = r2 @ w6 + b6
    assert jnp.allclose(q1, r1, atol=5e-2, rtol=5e-2), (q1 - r1)
    assert jnp.allclose(q2, r2, atol=5e-2, rtol=5e-2), (q2 - r2)

    print("KERNEL_OK")
</pallas_src>

<mosaic_0001>
module attributes {stable_mosaic.version = 11 : i64} {
  func.func @critic_flat_kernel(%arg0: i32, %arg1: memref<8x16xf32, #tpu.memory_space<vmem>>, %arg2: memref<8x4xf32, #tpu.memory_space<vmem>>, %arg3: memref<16x512xf32, #tpu.memory_space<vmem>>, %arg4: memref<4x512xf32, #tpu.memory_space<vmem>>, %arg5: memref<1x512xf32, #tpu.memory_space<vmem>>, %arg6: memref<256x256xbf16, #tpu.memory_space<vmem>>, %arg7: memref<1x256xf32, #tpu.memory_space<vmem>>, %arg8: memref<256x256xbf16, #tpu.memory_space<vmem>>, %arg9: memref<1x256xf32, #tpu.memory_space<vmem>>, %arg10: memref<1x256xf32, #tpu.memory_space<vmem>>, %arg11: memref<1x256xf32, #tpu.memory_space<vmem>>, %arg12: memref<1x2xf32, #tpu.memory_space<vmem>>, %arg13: memref<8x2xf32, #tpu.memory_space<vmem>>) attributes {dimension_semantics = [#tpu.dimension_semantics<parallel>], iteration_bounds = array<i64: 1>, scalar_prefetch = 0 : i64, scratch_operands = 0 : i64, tpu.core_type = #tpu.core_type<tc>, window_params = [{transform_indices = @transform_0, window_bounds = array<i64: 8, 16>}, {transform_indices = @transform_1, window_bounds = array<i64: 8, 4>}, {pipeline_mode = #tpu.pipeline_mode<synchronous>, transform_indices = @transform_2, window_bounds = array<i64: 16, 512>}, {pipeline_mode = #tpu.pipeline_mode<synchronous>, transform_indices = @transform_3, window_bounds = array<i64: 4, 512>}, {pipeline_mode = #tpu.pipeline_mode<synchronous>, transform_indices = @transform_4, window_bounds = array<i64: 1, 512>}, {pipeline_mode = #tpu.pipeline_mode<synchronous>, transform_indices = @transform_5, window_bounds = array<i64: 256, 256>}, {pipeline_mode = #tpu.pipeline_mode<synchronous>, transform_indices = @transform_6, window_bounds = array<i64: 1, 256>}, {pipeline_mode = #tpu.pipeline_mode<synchronous>, transform_indices = @transform_7, window_bounds = array<i64: 256, 256>}, {pipeline_mode = #tpu.pipeline_mode<synchronous>, transform_indices = @transform_8, window_bounds = array<i64: 1, 256>}, {pipeline_mode = #tpu.pipeline_mode<synchronous>, transform_indices = @transform_9, window_bounds = array<i64: 1, 256>}, {pipeline_mode = #tpu.pipeline_mode<synchronous>, transform_indices = @transform_10, window_bounds = array<i64: 1, 256>}, {pipeline_mode = #tpu.pipeline_mode<synchronous>, transform_indices = @transform_11, window_bounds = array<i64: 1, 2>}, {transform_indices = @transform_12, window_bounds = array<i64: 8, 2>}]} {
    %c0 = arith.constant 0 : index
    %c0_0 = arith.constant 0 : index
    %0 = vector.load %arg1[%c0, %c0_0] : memref<8x16xf32, #tpu.memory_space<vmem>>, vector<8x16xf32>
    %c0_1 = arith.constant 0 : index
    %c0_2 = arith.constant 0 : index
    %1 = vector.load %arg2[%c0_1, %c0_2] : memref<8x4xf32, #tpu.memory_space<vmem>>, vector<8x4xf32>
    %c0_3 = arith.constant 0 : index
    %c0_4 = arith.constant 0 : index
    %2 = vector.load %arg3[%c0_3, %c0_4] : memref<16x512xf32, #tpu.memory_space<vmem>>, vector<16x512xf32>
    %cst = arith.constant dense<0.000000e+00> : vector<8x512xf32>
    %3 = tpu.matmul %0, %2, %cst {dimension_numbers = #tpu.dot_dimension_numbers<[1], [0], [0], [1], [0, 0, 1, 1], [], []>} : vector<8x16xf32>, vector<16x512xf32>, vector<8x512xf32> -> vector<8x512xf32>
    %c0_5 = arith.constant 0 : index
    %c0_6 = arith.constant 0 : index
    %4 = vector.load %arg4[%c0_5, %c0_6] : memref<4x512xf32, #tpu.memory_space<vmem>>, vector<4x512xf32>
    %cst_7 = arith.constant dense<0.000000e+00> : vector<8x512xf32>
    %5 = tpu.matmul %1, %4, %cst_7 {dimension_numbers = #tpu.dot_dimension_numbers<[1], [0], [0], [1], [0, 0, 1, 1], [], []>} : vector<8x4xf32>, vector<4x512xf32>, vector<8x512xf32> -> vector<8x512xf32>
    %6 = arith.addf %3, %5 : vector<8x512xf32>
    %c0_8 = arith.constant 0 : index
    %c0_9 = arith.constant 0 : index
    %7 = vector.load %arg5[%c0_8, %c0_9] : memref<1x512xf32, #tpu.memory_space<vmem>>, vector<1x512xf32>
    %8 = vector.broadcast %7 : vector<1x512xf32> to vector<8x512xf32>
    %9 = arith.addf %6, %8 : vector<8x512xf32>
    %10 = arith.truncf %9 : vector<8x512xf32> to vector<8x512xbf16>
    %cst_10 = arith.constant 0.000000e+00 : bf16
    %11 = vector.broadcast %cst_10 : bf16 to vector<8x512xbf16>
    %12 = arith.maximumf %10, %11 : vector<8x512xbf16>
    %13 = vector.extract_strided_slice %12 {offsets = [0, 0], sizes = [8, 256], strides = [1, 1]} : vector<8x512xbf16> to vector<8x256xbf16>
    %14 = vector.extract_strided_slice %12 {offsets = [0, 256], sizes = [8, 256], strides = [1, 1]} : vector<8x512xbf16> to vector<8x256xbf16>
    %c0_11 = arith.constant 0 : index
    %c0_12 = arith.constant 0 : index
    %15 = vector.load %arg6[%c0_11, %c0_12] : memref<256x256xbf16, #tpu.memory_space<vmem>>, vector<256x256xbf16>
    %cst_13 = arith.constant dense<0.000000e+00> : vector<8x256xf32>
    %16 = tpu.matmul %13, %15, %cst_13 {dimension_numbers = #tpu.dot_dimension_numbers<[1], [0], [0], [1], [0, 0, 1, 1], [], []>} : vector<8x256xbf16>, vector<256x256xbf16>, vector<8x256xf32> -> vector<8x256xf32>
    %c0_14 = arith.constant 0 : index
    %c0_15 = arith.constant 0 : index
    %17 = vector.load %arg7[%c0_14, %c0_15] : memref<1x256xf32, #tpu.memory_space<vmem>>, vector<1x256xf32>
    %18 = vector.broadcast %17 : vector<1x256xf32> to vector<8x256xf32>
    %19 = arith.addf %16, %18 : vector<8x256xf32>
    %cst_16 = arith.constant 0.000000e+00 : f32
    %20 = vector.broadcast %cst_16 : f32 to vector<8x256xf32>
    %21 = arith.maximumf %19, %20 : vector<8x256xf32>
    %c0_17 = arith.constant 0 : index
    %c0_18 = arith.constant 0 : index
    %22 = vector.load %arg8[%c0_17, %c0_18] : memref<256x256xbf16, #tpu.memory_space<vmem>>, vector<256x256xbf16>
    %cst_19 = arith.constant dense<0.000000e+00> : vector<8x256xf32>
    %23 = tpu.matmul %14, %22, %cst_19 {dimension_numbers = #tpu.dot_dimension_numbers<[1], [0], [0], [1], [0, 0, 1, 1], [], []>} : vector<8x256xbf16>, vector<256x256xbf16>, vector<8x256xf32> -> vector<8x256xf32>
    %c0_20 = arith.constant 0 : index
    %c0_21 = arith.constant 0 : index
    %24 = vector.load %arg9[%c0_20, %c0_21] : memref<1x256xf32, #tpu.memory_space<vmem>>, vector<1x256xf32>
    %25 = vector.broadcast %24 : vector<1x256xf32> to vector<8x256xf32>
    %26 = arith.addf %23, %25 : vector<8x256xf32>
    %cst_22 = arith.constant 0.000000e+00 : f32
    %27 = vector.broadcast %cst_22 : f32 to vector<8x256xf32>
    %28 = arith.maximumf %26, %27 : vector<8x256xf32>
    %c0_23 = arith.constant 0 : index
    %c0_24 = arith.constant 0 : index
    %29 = vector.load %arg10[%c0_23, %c0_24] : memref<1x256xf32, #tpu.memory_space<vmem>>, vector<1x256xf32>
    %30 = vector.broadcast %29 : vector<1x256xf32> to vector<8x256xf32>
    %31 = arith.mulf %21, %30 : vector<8x256xf32>
    %cst_25 = arith.constant dense<0.000000e+00> : vector<8xf32>
    %32 = vector.multi_reduction <add>, %31, %cst_25 [1] : vector<8x256xf32> to vector<8xf32>
    %33 = vector.shape_cast %32 : vector<8xf32> to vector<8x1xf32>
    %c0_26 = arith.constant 0 : index
    %c0_27 = arith.constant 0 : index
    %34 = vector.load %arg11[%c0_26, %c0_27] : memref<1x256xf32, #tpu.memory_space<vmem>>, vector<1x256xf32>
    %35 = vector.broadcast %34 : vector<1x256xf32> to vector<8x256xf32>
    %36 = arith.mulf %28, %35 : vector<8x256xf32>
    %cst_28 = arith.constant dense<0.000000e+00> : vector<8xf32>
    %37 = vector.multi_reduction <add>, %36, %cst_28 [1] : vector<8x256xf32> to vector<8xf32>
    %38 = vector.shape_cast %37 : vector<8xf32> to vector<8x1xf32>
    %39 = tpu.iota {dimensions = array<i32: 1>} : vector<8x2xi32>
    %c0_i32 = arith.constant 0 : i32
    %40 = vector.broadcast %c0_i32 : i32 to vector<8x2xi32>
    %41 = arith.cmpi eq, %39, %40 : vector<8x2xi32>
    %42 = vector.shape_cast %33 : vector<8x1xf32> to vector<8x1xf32>
    %43 = vector.broadcast %42 : vector<8x1xf32> to vector<8x2xf32>
    %44 = vector.shape_cast %38 : vector<8x1xf32> to vector<8x1xf32>
    %45 = vector.broadcast %44 : vector<8x1xf32> to vector<8x2xf32>
    %46 = arith.select %41, %43, %45 : vector<8x2xi1>, vector<8x2xf32>
    %c0_29 = arith.constant 0 : index
    %c0_30 = arith.constant 0 : index
    %47 = vector.load %arg12[%c0_29, %c0_30] : memref<1x2xf32, #tpu.memory_space<vmem>>, vector<1x2xf32>
    %48 = vector.broadcast %47 : vector<1x2xf32> to vector<8x2xf32>
    %49 = arith.addf %46, %48 : vector<8x2xf32>
    %c0_31 = arith.constant 0 : index
    %c0_32 = arith.constant 0 : index
    %50 = vector.load %arg13[%c0_31, %c0_32] : memref<8x2xf32, #tpu.memory_space<vmem>>, vector<8x2xf32>
    tpu.vector_store %arg13[%c0_31, %c0_32], %49 {strides = array<i32>} : memref<8x2xf32, #tpu.memory_space<vmem>>, vector<8x2xf32>,
    return
  }
  func.func @transform_0(%arg0: i32) -> (i32, i32) {
    %c0_i32 = arith.constant 0 : i32
    %c0_i32_0 = arith.constant 0 : i32
    return %arg0, %c0_i32 : i32, i32
  }
  func.func @transform_1(%arg0: i32) -> (i32, i32) {
    %c0_i32 = arith.constant 0 : i32
    %c0_i32_0 = arith.constant 0 : i32
    return %arg0, %c0_i32 : i32, i32
  }
  func.func @transform_2(%arg0: i32) -> (i32, i32) {
    %c0_i32 = arith.constant 0 : i32
    %c0_i32_0 = arith.constant 0 : i32
    %c0_i32_1 = arith.constant 0 : i32
    return %c0_i32, %c0_i32_0 : i32, i32
  }
  func.func @transform_3(%arg0: i32) -> (i32, i32) {
    %c0_i32 = arith.constant 0 : i32
    %c0_i32_0 = arith.constant 0 : i32
    %c0_i32_1 = arith.constant 0 : i32
    return %c0_i32, %c0_i32_0 : i32, i32
  }
  func.func @transform_4(%arg0: i32) -> (i32, i32) {
    %c0_i32 = arith.constant 0 : i32
    %c0_i32_0 = arith.constant 0 : i32
    %c0_i32_1 = arith.constant 0 : i32
    return %c0_i32, %c0_i32_0 : i32, i32
  }
  func.func @transform_5(%arg0: i32) -> (i32, i32) {
    %c0_i32 = arith.constant 0 : i32
    %c0_i32_0 = arith.constant 0 : i32
    %c0_i32_1 = arith.constant 0 : i32
    return %c0_i32, %c0_i32_0 : i32, i32
  }
  func.func @transform_6(%arg0: i32) -> (i32, i32) {
    %c0_i32 = arith.constant 0 : i32
    %c0_i32_0 = arith.constant 0 : i32
    %c0_i32_1 = arith.constant 0 : i32
    return %c0_i32, %c0_i32_0 : i32, i32
  }
  func.func @transform_7(%arg0: i32) -> (i32, i32) {
    %c0_i32 = arith.constant 0 : i32
    %c0_i32_0 = arith.constant 0 : i32
    %c0_i32_1 = arith.constant 0 : i32
    return %c0_i32, %c0_i32_0 : i32, i32
  }
  func.func @transform_8(%arg0: i32) -> (i32, i32) {
    %c0_i32 = arith.constant 0 : i32
    %c0_i32_0 = arith.constant 0 : i32
    %c0_i32_1 = arith.constant 0 : i32
    return %c0_i32, %c0_i32_0 : i32, i32
  }
  func.func @transform_9(%arg0: i32) -> (i32, i32) {
    %c0_i32 = arith.constant 0 : i32
    %c0_i32_0 = arith.constant 0 : i32
    %c0_i32_1 = arith.constant 0 : i32
    return %c0_i32, %c0_i32_0 : i32, i32
  }
  func.func @transform_10(%arg0: i32) -> (i32, i32) {
    %c0_i32 = arith.constant 0 : i32
    %c0_i32_0 = arith.constant 0 : i32
    %c0_i32_1 = arith.constant 0 : i32
    return %c0_i32, %c0_i32_0 : i32, i32
  }
  func.func @transform_11(%arg0: i32) -> (i32, i32) {
    %c0_i32 = arith.constant 0 : i32
    %c0_i32_0 = arith.constant 0 : i32
    %c0_i32_1 = arith.constant 0 : i32
    return %c0_i32, %c0_i32_0 : i32, i32
  }
  func.func @transform_12(%arg0: i32) -> (i32, i32) {
    %c0_i32 = arith.constant 0 : i32
    %c0_i32_0 = arith.constant 0 : i32
    return %arg0, %c0_i32 : i32, i32
  }
}

module attributes {stable_mosaic.version = 11 : i64} {
  func.func @critic_flat_kernel(%arg0: i32, %arg1: memref<8x16xf32, #tpu.memory_space<vmem>>, %arg2: memref<8x4xf32, #tpu.memory_space<vmem>>, %arg3: memref<16x512xf32, #tpu.memory_space<vmem>>, %arg4: memref<4x512xf32, #tpu.memory_space<vmem>>, %arg5: memref<1x512xf32, #tpu.memory_space<vmem>>, %arg6: memref<256x256xbf16, #tpu.memory_space<vmem>>, %arg7: memref<1x256xf32, #tpu.memory_space<vmem>>, %arg8: memref<256x256xbf16, #tpu.memory_space<vmem>>, %arg9: memref<1x256xf32, #tpu.memory_space<vmem>>, %arg10: memref<1x256xf32, #tpu.memory_space<vmem>>, %arg11: memref<1x256xf32, #tpu.memory_space<vmem>>, %arg12: memref<1x2xf32, #tpu.memory_space<vmem>>, %arg13: memref<8x2xf32, #tpu.memory_space<vmem>>) attributes {dimension_semantics = [#tpu.dimension_semantics<parallel>], iteration_bounds = array<i64: 1>, scalar_prefetch = 0 : i64, scratch_operands = 0 : i64, tpu.core_type = #tpu.core_type<tc>, window_params = [{transform_indices = @transform_0, window_bounds = array<i64: 8, 16>}, {transform_indices = @transform_1, window_bounds = array<i64: 8, 4>}, {pipeline_mode = #tpu.pipeline_mode<synchronous>, transform_indices = @transform_2, window_bounds = array<i64: 16, 512>}, {pipeline_mode = #tpu.pipeline_mode<synchronous>, transform_indices = @transform_3, window_bounds = array<i64: 4, 512>}, {pipeline_mode = #tpu.pipeline_mode<synchronous>, transform_indices = @transform_4, window_bounds = array<i64: 1, 512>}, {pipeline_mode = #tpu.pipeline_mode<synchronous>, transform_indices = @transform_5, window_bounds = array<i64: 256, 256>}, {pipeline_mode = #tpu.pipeline_mode<synchronous>, transform_indices = @transform_6, window_bounds = array<i64: 1, 256>}, {pipeline_mode = #tpu.pipeline_mode<synchronous>, transform_indices = @transform_7, window_bounds = array<i64: 256, 256>}, {pipeline_mode = #tpu.pipeline_mode<synchronous>, transform_indices = @transform_8, window_bounds = array<i64: 1, 256>}, {pipeline_mode = #tpu.pipeline_mode<synchronous>, transform_indices = @transform_9, window_bounds = array<i64: 1, 256>}, {pipeline_mode = #tpu.pipeline_mode<synchronous>, transform_indices = @transform_10, window_bounds = array<i64: 1, 256>}, {pipeline_mode = #tpu.pipeline_mode<synchronous>, transform_indices = @transform_11, window_bounds = array<i64: 1, 2>}, {transform_indices = @transform_12, window_bounds = array<i64: 8, 2>}]} {
    %c0 = arith.constant 0 : index
    %c0_0 = arith.constant 0 : index
    %0 = vector.load %arg1[%c0, %c0_0] : memref<8x16xf32, #tpu.memory_space<vmem>>, vector<8x16xf32>
    %c0_1 = arith.constant 0 : index
    %c0_2 = arith.constant 0 : index
    %1 = vector.load %arg2[%c0_1, %c0_2] : memref<8x4xf32, #tpu.memory_space<vmem>>, vector<8x4xf32>
    %c0_3 = arith.constant 0 : index
    %c0_4 = arith.constant 0 : index
    %2 = vector.load %arg3[%c0_3, %c0_4] : memref<16x512xf32, #tpu.memory_space<vmem>>, vector<16x512xf32>
    %cst = arith.constant dense<0.000000e+00> : vector<8x512xf32>
    %3 = tpu.matmul %0, %2, %cst {dimension_numbers = #tpu.dot_dimension_numbers<[1], [0], [0], [1], [0, 0, 1, 1], [], []>} : vector<8x16xf32>, vector<16x512xf32>, vector<8x512xf32> -> vector<8x512xf32>
    %c0_5 = arith.constant 0 : index
    %c0_6 = arith.constant 0 : index
    %4 = vector.load %arg4[%c0_5, %c0_6] : memref<4x512xf32, #tpu.memory_space<vmem>>, vector<4x512xf32>
    %cst_7 = arith.constant dense<0.000000e+00> : vector<8x512xf32>
    %5 = tpu.matmul %1, %4, %cst_7 {dimension_numbers = #tpu.dot_dimension_numbers<[1], [0], [0], [1], [0, 0, 1, 1], [], []>} : vector<8x4xf32>, vector<4x512xf32>, vector<8x512xf32> -> vector<8x512xf32>
    %6 = arith.addf %3, %5 : vector<8x512xf32>
    %c0_8 = arith.constant 0 : index
    %c0_9 = arith.constant 0 : index
    %7 = vector.load %arg5[%c0_8, %c0_9] : memref<1x512xf32, #tpu.memory_space<vmem>>, vector<1x512xf32>
    %8 = vector.broadcast %7 : vector<1x512xf32> to vector<8x512xf32>
    %9 = arith.addf %6, %8 : vector<8x512xf32>
    %10 = arith.truncf %9 : vector<8x512xf32> to vector<8x512xbf16>
    %cst_10 = arith.constant 0.000000e+00 : bf16
    %11 = vector.broadcast %cst_10 : bf16 to vector<8x512xbf16>
    %12 = arith.maximumf %10, %11 : vector<8x512xbf16>
    %13 = vector.extract_strided_slice %12 {offsets = [0, 0], sizes = [8, 256], strides = [1, 1]} : vector<8x512xbf16> to vector<8x256xbf16>
    %14 = vector.extract_strided_slice %12 {offsets = [0, 256], sizes = [8, 256], strides = [1, 1]} : vector<8x512xbf16> to vector<8x256xbf16>
    %c0_11 = arith.constant 0 : index
    %c0_12 = arith.constant 0 : index
    %15 = vector.load %arg6[%c0_11, %c0_12] : memref<256x256xbf16, #tpu.memory_space<vmem>>, vector<256x256xbf16>
    %cst_13 = arith.constant dense<0.000000e+00> : vector<8x256xf32>
    %16 = tpu.matmul %13, %15, %cst_13 {dimension_numbers = #tpu.dot_dimension_numbers<[1], [0], [0], [1], [0, 0, 1, 1], [], []>} : vector<8x256xbf16>, vector<256x256xbf16>, vector<8x256xf32> -> vector<8x256xf32>
    %c0_14 = arith.constant 0 : index
    %c0_15 = arith.constant 0 : index
    %17 = vector.load %arg7[%c0_14, %c0_15] : memref<1x256xf32, #tpu.memory_space<vmem>>, vector<1x256xf32>
    %18 = vector.broadcast %17 : vector<1x256xf32> to vector<8x256xf32>
    %19 = arith.addf %16, %18 : vector<8x256xf32>
    %cst_16 = arith.constant 0.000000e+00 : f32
    %20 = vector.broadcast %cst_16 : f32 to vector<8x256xf32>
    %21 = arith.maximumf %19, %20 : vector<8x256xf32>
    %c0_17 = arith.constant 0 : index
    %c0_18 = arith.constant 0 : index
    %22 = vector.load %arg8[%c0_17, %c0_18] : memref<256x256xbf16, #tpu.memory_space<vmem>>, vector<256x256xbf16>
    %cst_19 = arith.constant dense<0.000000e+00> : vector<8x256xf32>
    %23 = tpu.matmul %14, %22, %cst_19 {dimension_numbers = #tpu.dot_dimension_numbers<[1], [0], [0], [1], [0, 0, 1, 1], [], []>} : vector<8x256xbf16>, vector<256x256xbf16>, vector<8x256xf32> -> vector<8x256xf32>
    %c0_20 = arith.constant 0 : index
    %c0_21 = arith.constant 0 : index
    %24 = vector.load %arg9[%c0_20, %c0_21] : memref<1x256xf32, #tpu.memory_space<vmem>>, vector<1x256xf32>
    %25 = vector.broadcast %24 : vector<1x256xf32> to vector<8x256xf32>
    %26 = arith.addf %23, %25 : vector<8x256xf32>
    %cst_22 = arith.constant 0.000000e+00 : f32
    %27 = vector.broadcast %cst_22 : f32 to vector<8x256xf32>
    %28 = arith.maximumf %26, %27 : vector<8x256xf32>
    %c0_23 = arith.constant 0 : index
    %c0_24 = arith.constant 0 : index
    %29 = vector.load %arg10[%c0_23, %c0_24] : memref<1x256xf32, #tpu.memory_space<vmem>>, vector<1x256xf32>
    %30 = vector.broadcast %29 : vector<1x256xf32> to vector<8x256xf32>
    %31 = arith.mulf %21, %30 : vector<8x256xf32>
    %cst_25 = arith.constant dense<0.000000e+00> : vector<8xf32>
    %32 = vector.multi_reduction <add>, %31, %cst_25 [1] : vector<8x256xf32> to vector<8xf32>
    %33 = vector.shape_cast %32 : vector<8xf32> to vector<8x1xf32>
    %c0_26 = arith.constant 0 : index
    %c0_27 = arith.constant 0 : index
    %34 = vector.load %arg11[%c0_26, %c0_27] : memref<1x256xf32, #tpu.memory_space<vmem>>, vector<1x256xf32>
    %35 = vector.broadcast %34 : vector<1x256xf32> to vector<8x256xf32>
    %36 = arith.mulf %28, %35 : vector<8x256xf32>
    %cst_28 = arith.constant dense<0.000000e+00> : vector<8xf32>
    %37 = vector.multi_reduction <add>, %36, %cst_28 [1] : vector<8x256xf32> to vector<8xf32>
    %38 = vector.shape_cast %37 : vector<8xf32> to vector<8x1xf32>
    %39 = tpu.iota {dimensions = array<i32: 1>} : vector<8x2xi32>
    %c0_i32 = arith.constant 0 : i32
    %40 = vector.broadcast %c0_i32 : i32 to vector<8x2xi32>
    %41 = arith.cmpi eq, %39, %40 : vector<8x2xi32>
    %42 = vector.shape_cast %33 : vector<8x1xf32> to vector<8x1xf32>
    %43 = vector.broadcast %42 : vector<8x1xf32> to vector<8x2xf32>
    %44 = vector.shape_cast %38 : vector<8x1xf32> to vector<8x1xf32>
    %45 = vector.broadcast %44 : vector<8x1xf32> to vector<8x2xf32>
    %46 = arith.select %41, %43, %45 : vector<8x2xi1>, vector<8x2xf32>
    %c0_29 = arith.constant 0 : index
    %c0_30 = arith.constant 0 : index
    %47 = vector.load %arg12[%c0_29, %c0_30] : memref<1x2xf32, #tpu.memory_space<vmem>>, vector<1x2xf32>
    %48 = vector.broadcast %47 : vector<1x2xf32> to vector<8x2xf32>
    %49 = arith.addf %46, %48 : vector<8x2xf32>
    %c0_31 = arith.constant 0 : index
    %c0_32 = arith.constant 0 : index
    %50 = vector.load %arg13[%c0_31, %c0_32] : memref<8x2xf32, #tpu.memory_space<vmem>>, vector<8x2xf32>
    tpu.vector_store %arg13[%c0_31, %c0_32], %49 {strides = array<i32>} : memref<8x2xf32, #tpu.memory_space<vmem>>, vector<8x2xf32>,
    return
  }
  func.func @transform_0(%arg0: i32) -> (i32, i32) {
    %c0_i32 = arith.constant 0 : i32
    %c0_i32_0 = arith.constant 0 : i32
    return %arg0, %c0_i32 : i32, i32
  }
  func.func @transform_1(%arg0: i32) -> (i32, i32) {
    %c0_i32 = arith.constant 0 : i32
    %c0_i32_0 = arith.constant 0 : i32
    return %arg0, %c0_i32 : i32, i32
  }
  func.func @transform_2(%arg0: i32) -> (i32, i32) {
    %c0_i32 = arith.constant 0 : i32
    %c0_i32_0 = arith.constant 0 : i32
    %c0_i32_1 = arith.constant 0 : i32
    return %c0_i32, %c0_i32_0 : i32, i32
  }
  func.func @transform_3(%arg0: i32) -> (i32, i32) {
    %c0_i32 = arith.constant 0 : i32
    %c0_i32_0 = arith.constant 0 : i32
    %c0_i32_1 = arith.constant 0 : i32
    return %c0_i32, %c0_i32_0 : i32, i32
  }
  func.func @transform_4(%arg0: i32) -> (i32, i32) {
    %c0_i32 = arith.constant 0 : i32
    %c0_i32_0 = arith.constant 0 : i32
    %c0_i32_1 = arith.constant 0 : i32
    return %c0_i32, %c0_i32_0 : i32, i32
  }
  func.func @transform_5(%arg0: i32) -> (i32, i32) {
    %c0_i32 = arith.constant 0 : i32
    %c0_i32_0 = arith.constant 0 : i32
    %c0_i32_1 = arith.constant 0 : i32
    return %c0_i32, %c0_i32_0 : i32, i32
  }
  func.func @transform_6(%arg0: i32) -> (i32, i32) {
    %c0_i32 = arith.constant 0 : i32
    %c0_i32_0 = arith.constant 0 : i32
    %c0_i32_1 = arith.constant 0 : i32
    return %c0_i32, %c0_i32_0 : i32, i32
  }
  func.func @transform_7(%arg0: i32) -> (i32, i32) {
    %c0_i32 = arith.constant 0 : i32
    %c0_i32_0 = arith.constant 0 : i32
    %c0_i32_1 = arith.constant 0 : i32
    return %c0_i32, %c0_i32_0 : i32, i32
  }
  func.func @transform_8(%arg0: i32) -> (i32, i32) {
    %c0_i32 = arith.constant 0 : i32
    %c0_i32_0 = arith.constant 0 : i32
    %c0_i32_1 = arith.constant 0 : i32
    return %c0_i32, %c0_i32_0 : i32, i32
  }
  func.func @transform_9(%arg0: i32) -> (i32, i32) {
    %c0_i32 = arith.constant 0 : i32
    %c0_i32_0 = arith.constant 0 : i32
    %c0_i32_1 = arith.constant 0 : i32
    return %c0_i32, %c0_i32_0 : i32, i32
  }
  func.func @transform_10(%arg0: i32) -> (i32, i32) {
    %c0_i32 = arith.constant 0 : i32
    %c0_i32_0 = arith.constant 0 : i32
    %c0_i32_1 = arith.constant 0 : i32
    return %c0_i32, %c0_i32_0 : i32, i32
  }
  func.func @transform_11(%arg0: i32) -> (i32, i32) {
    %c0_i32 = arith.constant 0 : i32
    %c0_i32_0 = arith.constant 0 : i32
    %c0_i32_1 = arith.constant 0 : i32
    return %c0_i32, %c0_i32_0 : i32, i32
  }
  func.func @transform_12(%arg0: i32) -> (i32, i32) {
    %c0_i32 = arith.constant 0 : i32
    %c0_i32_0 = arith.constant 0 : i32
    return %arg0, %c0_i32 : i32, i32
  }
}

</mosaic_0001>

<llo_original>
// kernel: tpu_custom_call.1
$region0: #{tpu_custom_call.1}
  #allocation0 [shape = 'u32[]', space=smem, size = 0x4, offset = 0x4, fixed_abs, tag = 'smem constant byte address 0x4 - core index']
  #allocation1 [shape = 'u32[72,128]{1,0:T(1,128)}', space=vmem, size = 0x9000, scoped, tag = 'internal scratch']
  %s0 = inlined_call_operand.vmem [shape: f32[8,16], index: 0, kind: input, shape index: {}]
  %s1 = inlined_call_operand.vmem [shape: f32[8,4], index: 1, kind: input, shape index: {}]
  %s2 = inlined_call_operand.hbm [shape: f32[16,512], index: 2, kind: input, shape index: {}]
  %s3 = inlined_call_operand.hbm [shape: f32[4,512], index: 3, kind: input, shape index: {}]
  %s4 = inlined_call_operand.vmem [shape: f32[1,512], index: 4, kind: input, shape index: {}]
  %s5 = inlined_call_operand.hbm [shape: bf16[256,256], index: 5, kind: input, shape index: {}]
  %s6 = inlined_call_operand.vmem [shape: f32[1,256], index: 6, kind: input, shape index: {}]
  %s7 = inlined_call_operand.hbm [shape: bf16[256,256], index: 7, kind: input, shape index: {}]
  %s8 = inlined_call_operand.vmem [shape: f32[1,256], index: 8, kind: input, shape index: {}]
  %s9 = inlined_call_operand.vmem [shape: f32[1,256], index: 9, kind: input, shape index: {}]
  %s10 = inlined_call_operand.vmem [shape: f32[1,256], index: 10, kind: input, shape index: {}]
  %s11 = inlined_call_operand.vmem [shape: f32[1,2], index: 11, kind: input, shape index: {}]
  %s12 = inlined_call_operand.vmem [shape: f32[8,2], index: 12, kind: output, shape index: {}]
  %s13 = sld [smem:[#allocation0]]
  $region74: #{tpu_custom_call.1} parent=0
    _
  %s15 = ssub.s32 1, %s13
  %s16 = scalar_select 0, %s15, %s13
  $region1: #{tpu_custom_call.1} parent=0
    #allocation2 [shape = 'u8[32768]{0}', space=vmem, size = 0x8000, scoped, tag = 'input window, operand 2, single buffered']
    #allocation3 [shape = 's32[1]{0}', space=sflag, size = 0x4, scoped, tag = 'scoped memory for tpu_custom_call.1']
    #allocation4 [shape = 'u8[8192]{0}', space=vmem, size = 0x2000, scoped, tag = 'input window, operand 3, single buffered']
    #allocation5 [shape = 's32[1]{0}', space=sflag, size = 0x4, scoped, tag = 'scoped memory for tpu_custom_call.1']
    #allocation6 [shape = 'u8[131072]{0}', space=vmem, size = 0x20000, scoped, tag = 'input window, operand 5, single buffered']
    #allocation7 [shape = 'u8[131072]{0}', space=vmem, size = 0x20000, scoped, tag = 'input window, operand 7, single buffered']
    #allocation8 [shape = 's32[1]{0}', space=sflag, size = 0x4, scoped, tag = 'scoped memory for tpu_custom_call.1']
    %17 = vsyncpa [#allocation3], 0
    %18 = vsyncpa [#allocation5], 0
    %19 = vsyncpa [#allocation8], 0
    // Predicated region
    $region2: #{tpu_custom_call.1} parent=1 // pred_check
      _
    $region3: #{tpu_custom_call.1} parent=1 // pred_check_branch
      %21 = sbr.rel (0) target = $region5
    $region4: #{tpu_custom_call.1} parent=1 // pred_region
      _
    $region5: #{tpu_custom_call.1} parent=1 // pred_fallthru
      _
    // Predicated region
    $region6: #{tpu_custom_call.1} parent=1 // pred_check
      _
    $region7: #{tpu_custom_call.1} parent=1 // pred_check_branch
      %23 = sbr.rel (0) target = $region9
    $region8: #{tpu_custom_call.1} parent=1 // pred_region
      _
    $region9: #{tpu_custom_call.1} parent=1 // pred_fallthru
      _
    // Predicated region
    $region10: #{tpu_custom_call.1} parent=1 // pred_check
      _
    $region11: #{tpu_custom_call.1} parent=1 // pred_check_branch
      %25 = sbr.rel (0) target = $region13
    $region12: #{tpu_custom_call.1} parent=1 // pred_region
      %27 = vsyncadd [#allocation3], 0
      %s28 = sshll.u32 %s2, 4
      %s29 = int_to_ptr.hbm [resolvable:$true] %s28
      %s30 = sshll.u32 [#allocation2], 4
      %s31 = int_to_ptr.vmem [resolvable:$true] %s30
      %36 = dma.hbm_to_vmem [thread:$0]  %s29, 1024, %s31, [#allocation3], 512, 512, 32
    $region13: #{tpu_custom_call.1} parent=1 // pred_fallthru
      _
    // Predicated region
    $region14: #{tpu_custom_call.1} parent=1 // pred_check
      _
    $region15: #{tpu_custom_call.1} parent=1 // pred_check_branch
      %38 = sbr.rel (0) target = $region17
    $region16: #{tpu_custom_call.1} parent=1 // pred_region
      %40 = vsyncadd [#allocation5], 0
      %s42 = sshll.u32 %s3, 4
      %s43 = int_to_ptr.hbm [resolvable:$true] %s42
      %s44 = sshll.u32 [#allocation4], 4
      %s45 = int_to_ptr.vmem [resolvable:$true] %s44
      %47 = dma.hbm_to_vmem [thread:$0]  %s43, 256, %s45, [#allocation5]
    $region17: #{tpu_custom_call.1} parent=1 // pred_fallthru
      _
    // Predicated region
    $region18: #{tpu_custom_call.1} parent=1 // pred_check
      _
    $region19: #{tpu_custom_call.1} parent=1 // pred_check_branch
      %49 = sbr.rel (0) target = $region21
    $region20: #{tpu_custom_call.1} parent=1 // pred_region
      _
    $region21: #{tpu_custom_call.1} parent=1 // pred_fallthru
      _
    // Predicated region
    $region22: #{tpu_custom_call.1} parent=1 // pred_check
      _
    $region23: #{tpu_custom_call.1} parent=1 // pred_check_branch
      %51 = sbr.rel (0) target = $region25
    $region24: #{tpu_custom_call.1} parent=1 // pred_region
      %53 = vsyncadd [#allocation5], 0
      %s54 = sshll.u32 %s5, 4
      %s55 = int_to_ptr.hbm [resolvable:$true] %s54
      %s56 = sshll.u32 [#allocation6], 4
      %s57 = int_to_ptr.vmem [resolvable:$true] %s56
      %62 = dma.hbm_to_vmem [thread:$0]  %s55, 4096, %s57, [#allocation5], 128, 128, 8
    $region25: #{tpu_custom_call.1} parent=1 // pred_fallthru
      _
    // Predicated region
    $region26: #{tpu_custom_call.1} parent=1 // pred_check
      _
    $region27: #{tpu_custom_call.1} parent=1 // pred_check_branch
      %64 = sbr.rel (0) target = $region29
    $region28: #{tpu_custom_call.1} parent=1 // pred_region
      _
    $region29: #{tpu_custom_call.1} parent=1 // pred_fallthru
      _
    // Predicated region
    $region30: #{tpu_custom_call.1} parent=1 // pred_check
      _
    $region31: #{tpu_custom_call.1} parent=1 // pred_check_branch
      %66 = sbr.rel (0) target = $region33
    $region32: #{tpu_custom_call.1} parent=1 // pred_region
      %68 = vsyncadd [#allocation8], 0
      %s69 = sshll.u32 %s7, 4
      %s70 = int_to_ptr.hbm [resolvable:$true] %s69
      %s71 = sshll.u32 [#allocation7], 4
      %s72 = int_to_ptr.vmem [resolvable:$true] %s71
      %77 = dma.hbm_to_vmem [thread:$0]  %s70, 4096, %s72, [#allocation8], 128, 128, 8
    $region33: #{tpu_custom_call.1} parent=1 // pred_fallthru
      _
    // Predicated region
    $region34: #{tpu_custom_call.1} parent=1 // pred_check
      _
    $region35: #{tpu_custom_call.1} parent=1 // pred_check_branch
      %79 = sbr.rel (0) target = $region37
    $region36: #{tpu_custom_call.1} parent=1 // pred_region
      _
    $region37: #{tpu_custom_call.1} parent=1 // pred_fallthru
      _
    // Predicated region
    $region38: #{tpu_custom_call.1} parent=1 // pred_check
      _
    $region39: #{tpu_custom_call.1} parent=1 // pred_check_branch
      %81 = sbr.rel (0) target = $region41
    $region40: #{tpu_custom_call.1} parent=1 // pred_region
      _
    $region41: #{tpu_custom_call.1} parent=1 // pred_fallthru
      _
    // Predicated region
    $region42: #{tpu_custom_call.1} parent=1 // pred_check
      _
    $region43: #{tpu_custom_call.1} parent=1 // pred_check_branch
      %83 = sbr.rel (0) target = $region45
    $region44: #{tpu_custom_call.1} parent=1 // pred_region
      _
    $region45: #{tpu_custom_call.1} parent=1 // pred_fallthru
      _
    // Predicated region
    $region46: #{tpu_custom_call.1} parent=1 // pred_check
      _
    $region47: #{tpu_custom_call.1} parent=1 // pred_check_branch
      %85 = sbr.rel (0) target = $region49
    $region48: #{tpu_custom_call.1} parent=1 // pred_region
      _
    $region49: #{tpu_custom_call.1} parent=1 // pred_fallthru
      _
    // Predicated region
    $region50: #{tpu_custom_call.1} parent=1 // pred_check
      _
    $region51: #{tpu_custom_call.1} parent=1 // pred_check_branch
      %87 = sbr.rel (0) target = $region53
    $region52: #{tpu_custom_call.1} parent=1 // pred_region
      %89 = dma.done [#allocation3], 1024
    $region53: #{tpu_custom_call.1} parent=1 // pred_fallthru
      _
    // Predicated region
    $region54: #{tpu_custom_call.1} parent=1 // pred_check
      _
    $region55: #{tpu_custom_call.1} parent=1 // pred_check_branch
      %91 = sbr.rel (0) target = $region57
    $region56: #{tpu_custom_call.1} parent=1 // pred_region
      %93 = dma.done [#allocation5], 256
    $region57: #{tpu_custom_call.1} parent=1 // pred_fallthru
      _
    // Predicated region
    $region58: #{tpu_custom_call.1} parent=1 // pred_check
      _
    $region59: #{tpu_custom_call.1} parent=1 // pred_check_branch
      %95 = sbr.rel (0) target = $region61
    $region60: #{tpu_custom_call.1} parent=1 // pred_region
      %97 = dma.done [#allocation5], 4096
    $region61: #{tpu_custom_call.1} parent=1 // pred_fallthru
      _
    // Predicated region
    $region62: #{tpu_custom_call.1} parent=1 // pred_check
      _
    $region63: #{tpu_custom_call.1} parent=1 // pred_check_branch
      %99 = sbr.rel (0) target = $region65
    $region64: #{tpu_custom_call.1} parent=1 // pred_region
      %101 = dma.done [#allocation8], 4096
    $region65: #{tpu_custom_call.1} parent=1 // pred_fallthru
      _
    %v102 = vld [vmem:[%s0] sm:$0xff]
    %v103 = vld [vmem:[%s1] sm:$0xff]
    %v104 = vld [vmem:[#allocation2] sm:$0xff]
    %v105 = vld [vmem:[#allocation2 + $0x8] sm:$0xff]
    %v106 = vld [vmem:[#allocation2 + $0x10] sm:$0xff]
    %v107 = vld [vmem:[#allocation2 + $0x18] sm:$0xff]
    %v108 = vld [vmem:[#allocation2 + $0x20] sm:$0xff]
    %v109 = vld [vmem:[#allocation2 + $0x28] sm:$0xff]
    %v110 = vld [vmem:[#allocation2 + $0x30] sm:$0xff]
    %v111 = vld [vmem:[#allocation2 + $0x38] sm:$0xff]
    %v112 = vld [vmem:[#allocation4] sm:$0xff]
    %v113 = vld [vmem:[#allocation4 + $0x8] sm:$0xff]
    %116 = vst [vmem:[#allocation1] ss:$2 sm:$0xff] %v112
    %s117 = scalar_lea.vmem [#allocation1], 16
    %118 = vst [vmem:[%s117] ss:$2 sm:$0xff] %v113
    %v119 = vld.sshfl [vmem:[#allocation1] sm:$0xff pattern:$0x75316420]
    %v120 = vld.sshfl [vmem:[#allocation1 + $0x8] sm:$0xff pattern:$0x75316420]
    %v121 = vld.sshfl [vmem:[#allocation1 + $0x10] sm:$0xff pattern:$0x75316420]
    %v122 = vld.sshfl [vmem:[#allocation1 + $0x18] sm:$0xff pattern:$0x75316420]
    %vm123 = vcmask 31744
    %v125 = vsel %vm123, %v103, 0
    %vm127 = vcmask 1043456
    %v128 = vsel %vm127, %v119, 0
    %v130 = vsel %vm127, %v120, 0
    %v132 = vsel %vm127, %v121, 0
    %v134 = vsel %vm127, %v122, 0
    %136 = vmatpush.msra.mxu0 0.0
    %137 = vmatpush.msra.mxu0 0.0
    %138 = vmatpush.msra.mxu0 0.0
    %139 = vmatpush.msra.mxu0 0.0
    %140 = vmatpush.msra.mxu0 0.0
    %141 = vmatpush.msra.mxu0 0.0
    %142 = vmatpush.msra.mxu0 0.0
    %143 = vmatpush.msra.mxu0 0.0
    %144 = vmatpush.msra.mxu0 0.0
    %145 = vmatpush.msra.mxu0 0.0
    %146 = vmatpush.msra.mxu0 0.0
    %147 = vmatpush.msra.mxu0 0.0
    %148 = vmatpush.msra.mxu0 0.0
    %149 = vmatpush.msra.mxu0 0.0
    %150 = vmatpush.msra.mxu0 0.0
    %151 = vmatpush.msra.mxu0 %v128
    %152 = vmatmul.f32.gmra.mxu0 %v125
    %v153 = vpop.f32.mrf.mxu0
    %v154 = vadd.f32 0.0, %v153
    %155 = vdwg.mxu0
    %156 = vmatpush.msra.mxu0 0.0
    %157 = vmatpush.msra.mxu0 0.0
    %158 = vmatpush.msra.mxu0 0.0
    %159 = vmatpush.msra.mxu0 0.0
    %160 = vmatpush.msra.mxu0 0.0
    %161 = vmatpush.msra.mxu0 0.0
    %162 = vmatpush.msra.mxu0 0.0
    %163 = vmatpush.msra.mxu0 0.0
    %164 = vmatpush.msra.mxu0 0.0
    %165 = vmatpush.msra.mxu0 0.0
    %166 = vmatpush.msra.mxu0 0.0
    %167 = vmatpush.msra.mxu0 0.0
    %168 = vmatpush.msra.mxu0 0.0
    %169 = vmatpush.msra.mxu0 0.0
    %170 = vmatpush.msra.mxu0 0.0
    %171 = vmatpush.msra.mxu0 %v130
    %172 = vmatmul.f32.gmra.mxu0 %v125
    %v173 = vpop.f32.mrf.mxu0
    %v174 = vadd.f32 0.0, %v173
    %175 = vdwg.mxu0
    %176 = vmatpush.msra.mxu0 0.0
    %177 = vmatpush.msra.mxu0 0.0
    %178 = vmatpush.msra.mxu0 0.0
    %179 = vmatpush.msra.mxu0 0.0
    %180 = vmatpush.msra.mxu0 0.0
    %181 = vmatpush.msra.mxu0 0.0
    %182 = vmatpush.msra.mxu0 0.0
    %183 = vmatpush.msra.mxu0 0.0
    %184 = vmatpush.msra.mxu0 0.0
    %185 = vmatpush.msra.mxu0 0.0
    %186 = vmatpush.msra.mxu0 0.0
    %187 = vmatpush.msra.mxu0 0.0
    %188 = vmatpush.msra.mxu0 0.0
    %189 = vmatpush.msra.mxu0 0.0
    %190 = vmatpush.msra.mxu0 0.0
    %191 = vmatpush.msra.mxu0 %v132
    %192 = vmatmul.f32.gmra.mxu0 %v125
    %v193 = vpop.f32.mrf.mxu0
    %v194 = vadd.f32 0.0, %v193
    %195 = vdwg.mxu0
    %196 = vmatpush.msra.mxu0 0.0
    %197 = vmatpush.msra.mxu0 0.0
    %198 = vmatpush.msra.mxu0 0.0
    %199 = vmatpush.msra.mxu0 0.0
    %200 = vmatpush.msra.mxu0 0.0
    %201 = vmatpush.msra.mxu0 0.0
    %202 = vmatpush.msra.mxu0 0.0
    %203 = vmatpush.msra.mxu0 0.0
    %204 = vmatpush.msra.mxu0 0.0
    %205 = vmatpush.msra.mxu0 0.0
    %206 = vmatpush.msra.mxu0 0.0
    %207 = vmatpush.msra.mxu0 0.0
    %208 = vmatpush.msra.mxu0 0.0
    %209 = vmatpush.msra.mxu0 0.0
    %210 = vmatpush.msra.mxu0 0.0
    %211 = vmatpush.msra.mxu0 %v134
    %212 = vmatmul.f32.gmra.mxu0 %v125
    %v213 = vpop.f32.mrf.mxu0
    %v214 = vadd.f32 0.0, %v213
    %215 = vdwg.mxu0
    %vm216 = vcmask 130048
    %v218 = vsel %vm216, %v102, 0
    %220 = vmatpush.msra.mxu0 0.0
    %221 = vmatpush.msra.mxu0 0.0
    %222 = vmatpush.msra.mxu0 0.0
    %223 = vmatpush.msra.mxu0 0.0
    %224 = vmatpush.msra.mxu0 0.0
    %225 = vmatpush.msra.mxu0 0.0
    %226 = vmatpush.msra.mxu0 0.0
    %227 = vmatpush.msra.mxu0 0.0
    %228 = vmatpush.msra.mxu0 0.0
    %229 = vmatpush.msra.mxu0 0.0
    %230 = vmatpush.msra.mxu0 0.0
    %231 = vmatpush.msra.mxu0 0.0
    %232 = vmatpush.msra.mxu0 0.0
    %233 = vmatpush.msra.mxu0 0.0
    %234 = vmatpush.msra.mxu0 %v108
    %235 = vmatpush.msra.mxu0 %v104
    %236 = vmatmul.f32.gmra.mxu0 %v218
    %v237 = vpop.f32.mrf.mxu0
    %v238 = vadd.f32 %v154, %v237
    %239 = vdwg.mxu0
    %240 = vmatpush.msra.mxu0 0.0
    %241 = vmatpush.msra.mxu0 0.0
    %242 = vmatpush.msra.mxu0 0.0
    %243 = vmatpush.msra.mxu0 0.0
    %244 = vmatpush.msra.mxu0 0.0
    %245 = vmatpush.msra.mxu0 0.0
    %246 = vmatpush.msra.mxu0 0.0
    %247 = vmatpush.msra.mxu0 0.0
    %248 = vmatpush.msra.mxu0 0.0
    %249 = vmatpush.msra.mxu0 0.0
    %250 = vmatpush.msra.mxu0 0.0
    %251 = vmatpush.msra.mxu0 0.0
    %252 = vmatpush.msra.mxu0 0.0
    %253 = vmatpush.msra.mxu0 0.0
    %254 = vmatpush.msra.mxu0 %v109
    %255 = vmatpush.msra.mxu0 %v105
    %256 = vmatmul.f32.gmra.mxu0 %v218
    %v257 = vpop.f32.mrf.mxu0
    %v258 = vadd.f32 %v174, %v257
    %259 = vdwg.mxu0
    %260 = vmatpush.msra.mxu0 0.0
    %261 = vmatpush.msra.mxu0 0.0
    %262 = vmatpush.msra.mxu0 0.0
    %263 = vmatpush.msra.mxu0 0.0
    %264 = vmatpush.msra.mxu0 0.0
    %265 = vmatpush.msra.mxu0 0.0
    %266 = vmatpush.msra.mxu0 0.0
    %267 = vmatpush.msra.mxu0 0.0
    %268 = vmatpush.msra.mxu0 0.0
    %269 = vmatpush.msra.mxu0 0.0
    %270 = vmatpush.msra.mxu0 0.0
    %271 = vmatpush.msra.mxu0 0.0
    %272 = vmatpush.msra.mxu0 0.0
    %273 = vmatpush.msra.mxu0 0.0
    %274 = vmatpush.msra.mxu0 %v110
    %275 = vmatpush.msra.mxu0 %v106
    %276 = vmatmul.f32.gmra.mxu0 %v218
    %v277 = vpop.f32.mrf.mxu0
    %v278 = vadd.f32 %v194, %v277
    %279 = vdwg.mxu0
    %280 = vmatpush.msra.mxu0 0.0
    %281 = vmatpush.msra.mxu0 0.0
    %282 = vmatpush.msra.mxu0 0.0
    %283 = vmatpush.msra.mxu0 0.0
    %284 = vmatpush.msra.mxu0 0.0
    %285 = vmatpush.msra.mxu0 0.0
    %286 = vmatpush.msra.mxu0 0.0
    %287 = vmatpush.msra.mxu0 0.0
    %288 = vmatpush.msra.mxu0 0.0
    %289 = vmatpush.msra.mxu0 0.0
    %290 = vmatpush.msra.mxu0 0.0
    %291 = vmatpush.msra.mxu0 0.0
    %292 = vmatpush.msra.mxu0 0.0
    %293 = vmatpush.msra.mxu0 0.0
    %294 = vmatpush.msra.mxu0 %v111
    %295 = vmatpush.msra.mxu0 %v107
    %296 = vmatmul.f32.gmra.mxu0 %v218
    %v297 = vpop.f32.mrf.mxu0
    %v298 = vadd.f32 %v214, %v297
    %299 = vdwg.mxu0
    %v300 = vld [vmem:[%s4] sm:$0xf]
    %v302 = vperm.slane %v300, 0
    %v303 = vperm.slane %v300, 1
    %v304 = vperm.slane %v300, 2
    %v305 = vperm.slane %v300, 3
    %v310 = vadd.f32 %v238, %v302
    %v311 = vadd.f32 %v258, %v303
    %v312 = vadd.f32 %v278, %v304
    %v313 = vadd.f32 %v298, %v305
    %v314 = vpack.c.bf16 %v311, %v310
    %v315 = vpack.c.bf16 %v313, %v312
    %v316 = vunpack.c.l.bf16 %v314
    %v317 = vunpack.c.h.bf16 %v314
    %v318 = vunpack.c.l.bf16 %v315
    %v319 = vunpack.c.h.bf16 %v315
    %v320 = vmax.f32 %v316, 0.0
    %v321 = vmax.f32 %v317, 0.0
    %v322 = vmax.f32 %v318, 0.0
    %v323 = vmax.f32 %v319, 0.0
    %v324 = vpack.c.bf16 %v321, %v320
    %v325 = vpack.c.bf16 %v323, %v322
    %v326 = vld [vmem:[#allocation6] sm:$0xff]
    %v327 = vld [vmem:[#allocation6 + $0x8] sm:$0xff]
    %v328 = vld [vmem:[#allocation6 + $0x10] sm:$0xff]
    %v329 = vld [vmem:[#allocation6 + $0x18] sm:$0xff]
    %v330 = vld [vmem:[#allocation6 + $0x20] sm:$0xff]
    %v331 = vld [vmem:[#allocation6 + $0x28] sm:$0xff]
    %v332 = vld [vmem:[#allocation6 + $0x30] sm:$0xff]
    %v333 = vld [vmem:[#allocation6 + $0x38] sm:$0xff]
    %v334 = vld [vmem:[#allocation6 + $0x40] sm:$0xff]
    %v335 = vld [vmem:[#allocation6 + $0x48] sm:$0xff]
    %v336 = vld [vmem:[#allocation6 + $0x50] sm:$0xff]
    %v337 = vld [vmem:[#allocation6 + $0x58] sm:$0xff]
    %v338 = vld [vmem:[#allocation6 + $0x60] sm:$0xff]
    %v339 = vld [vmem:[#allocation6 + $0x68] sm:$0xff]
    %v340 = vld [vmem:[#allocation6 + $0x70] sm:$0xff]
    %v341 = vld [vmem:[#allocation6 + $0x78] sm:$0xff]
    %v342 = vld [vmem:[#allocation6 + $0x80] sm:$0xff]
    %v343 = vld [vmem:[#allocation6 + $0x88] sm:$0xff]
    %v344 = vld [vmem:[#allocation6 + $0x90] sm:$0xff]
    %v345 = vld [vmem:[#allocation6 + $0x98] sm:$0xff]
    %v346 = vld [vmem:[#allocation6 + $0xa0] sm:$0xff]
    %v347 = vld [vmem:[#allocation6 + $0xa8] sm:$0xff]
    %v348 = vld [vmem:[#allocation6 + $0xb0] sm:$0xff]
    %v349 = vld [vmem:[#allocation6 + $0xb8] sm:$0xff]
    %v350 = vld [vmem:[#allocation6 + $0xc0] sm:$0xff]
    %v351 = vld [vmem:[#allocation6 + $0xc8] sm:$0xff]
    %v352 = vld [vmem:[#allocation6 + $0xd0] sm:$0xff]
    %v353 = vld [vmem:[#allocation6 + $0xd8] sm:$0xff]
    %v354 = vld [vmem:[#allocation6 + $0xe0] sm:$0xff]
    %v355 = vld [vmem:[#allocation6 + $0xe8] sm:$0xff]
    %v356 = vld [vmem:[#allocation6 + $0xf0] sm:$0xff]
    %v357 = vld [vmem:[#allocation6 + $0xf8] sm:$0xff]
    %v358 = vld [vmem:[%s6] sm:$0x3]
    %v360 = vperm.slane %v358, 0
    %v361 = vperm.slane %v358, 1
    %v365 = vunpack.c.l.b16 %v324
    %v366 = vunpack.c.h.b16 %v324
    %v367 = vpack.c.b16 %v365, %v365
    %v368 = vpack.c.b16 %v366, %v366
    %v403 = vunpack.c.l.b16 %v326
    %v404 = vunpack.c.h.b16 %v326
    %v405 = vunpack.c.l.b16 %v327
    %v406 = vunpack.c.h.b16 %v327
    %v407 = vunpack.c.l.b16 %v328
    %v408 = vunpack.c.h.b16 %v328
    %v409 = vunpack.c.l.b16 %v329
    %v410 = vunpack.c.h.b16 %v329
    %v411 = vunpack.c.l.b16 %v330
    %v412 = vunpack.c.h.b16 %v330
    %v413 = vunpack.c.l.b16 %v331
    %v414 = vunpack.c.h.b16 %v331
    %v415 = vunpack.c.l.b16 %v332
    %v416 = vunpack.c.h.b16 %v332
    %v417 = vunpack.c.l.b16 %v333
    %v418 = vunpack.c.h.b16 %v333
    %v419 = vunpack.c.l.b16 %v334
    %v420 = vunpack.c.h.b16 %v334
    %v421 = vunpack.c.l.b16 %v335
    %v422 = vunpack.c.h.b16 %v335
    %v423 = vunpack.c.l.b16 %v336
    %v424 = vunpack.c.h.b16 %v336
    %v425 = vunpack.c.l.b16 %v337
    %v426 = vunpack.c.h.b16 %v337
    %v427 = vunpack.c.l.b16 %v338
    %v428 = vunpack.c.h.b16 %v338
    %v429 = vunpack.c.l.b16 %v339
    %v430 = vunpack.c.h.b16 %v339
    %v431 = vunpack.c.l.b16 %v340
    %v432 = vunpack.c.h.b16 %v340
    %v433 = vunpack.c.l.b16 %v341
    %v434 = vunpack.c.h.b16 %v341
    %v435 = vunpack.c.l.b16 %v342
    %v436 = vunpack.c.h.b16 %v342
    %v437 = vunpack.c.l.b16 %v343
    %v438 = vunpack.c.h.b16 %v343
    %v439 = vunpack.c.l.b16 %v344
    %v440 = vunpack.c.h.b16 %v344
    %v441 = vunpack.c.l.b16 %v345
    %v442 = vunpack.c.h.b16 %v345
    %v443 = vunpack.c.l.b16 %v346
    %v444 = vunpack.c.h.b16 %v346
    %v445 = vunpack.c.l.b16 %v347
    %v446 = vunpack.c.h.b16 %v347
    %v447 = vunpack.c.l.b16 %v348
    %v448 = vunpack.c.h.b16 %v348
    %v449 = vunpack.c.l.b16 %v349
    %v450 = vunpack.c.h.b16 %v349
    %v451 = vunpack.c.l.b16 %v350
    %v452 = vunpack.c.h.b16 %v350
    %v453 = vunpack.c.l.b16 %v351
    %v454 = vunpack.c.h.b16 %v351
    %v455 = vunpack.c.l.b16 %v352
    %v456 = vunpack.c.h.b16 %v352
    %v457 = vunpack.c.l.b16 %v353
    %v458 = vunpack.c.h.b16 %v353
    %v459 = vunpack.c.l.b16 %v354
    %v460 = vunpack.c.h.b16 %v354
    %v461 = vunpack.c.l.b16 %v355
    %v462 = vunpack.c.h.b16 %v355
    %v463 = vunpack.c.l.b16 %v356
    %v464 = vunpack.c.h.b16 %v356
    %v465 = vunpack.c.l.b16 %v357
    %v466 = vunpack.c.h.b16 %v357
    %v467 = vpack.c.b16 %v405, %v403
    %v468 = vpack.c.b16 %v406, %v404
    %v469 = vpack.c.b16 %v409, %v407
    %v470 = vpack.c.b16 %v410, %v408
    %v471 = vpack.c.b16 %v413, %v411
    %v472 = vpack.c.b16 %v414, %v412
    %v473 = vpack.c.b16 %v417, %v415
    %v474 = vpack.c.b16 %v418, %v416
    %v475 = vpack.c.b16 %v421, %v419
    %v476 = vpack.c.b16 %v422, %v420
    %v477 = vpack.c.b16 %v425, %v423
    %v478 = vpack.c.b16 %v426, %v424
    %v479 = vpack.c.b16 %v429, %v427
    %v480 = vpack.c.b16 %v430, %v428
    %v481 = vpack.c.b16 %v433, %v431
    %v482 = vpack.c.b16 %v434, %v432
    %v483 = vpack.c.b16 %v437, %v435
    %v484 = vpack.c.b16 %v438, %v436
    %v485 = vpack.c.b16 %v441, %v439
    %v486 = vpack.c.b16 %v442, %v440
    %v487 = vpack.c.b16 %v445, %v443
    %v488 = vpack.c.b16 %v446, %v444
    %v489 = vpack.c.b16 %v449, %v447
    %v490 = vpack.c.b16 %v450, %v448
    %v491 = vpack.c.b16 %v453, %v451
    %v492 = vpack.c.b16 %v454, %v452
    %v493 = vpack.c.b16 %v457, %v455
    %v494 = vpack.c.b16 %v458, %v456
    %v495 = vpack.c.b16 %v461, %v459
    %v496 = vpack.c.b16 %v462, %v460
    %v497 = vpack.c.b16 %v465, %v463
    %v498 = vpack.c.b16 %v466, %v464
    %531 = vmatpush.bf16.msra.mxu0 %v481
    %532 = vmatpush.bf16.msra.mxu0 %v479
    %533 = vmatpush.bf16.msra.mxu0 %v477
    %534 = vmatpush.bf16.msra.mxu0 %v475
    %535 = vmatpush.bf16.msra.mxu0 %v473
    %536 = vmatpush.bf16.msra.mxu0 %v471
    %537 = vmatpush.bf16.msra.mxu0 %v469
    %538 = vmatpush.bf16.msra.mxu0 %v467
    %539 = vmatmul.bf16.gmra.mxu0 %v367
    %v540 = vpop.f32.mrf.mxu0
    %v541 = vadd.f32 %v360, %v540
    %v542 = vpop.f32.mrf.mxu0
    %543 = vdwg.mxu0
    %544 = vmatpush.bf16.msra.mxu0 %v497
    %545 = vmatpush.bf16.msra.mxu0 %v495
    %546 = vmatpush.bf16.msra.mxu0 %v493
    %547 = vmatpush.bf16.msra.mxu0 %v491
    %548 = vmatpush.bf16.msra.mxu0 %v489
    %549 = vmatpush.bf16.msra.mxu0 %v487
    %550 = vmatpush.bf16.msra.mxu0 %v485
    %551 = vmatpush.bf16.msra.mxu0 %v483
    %552 = vmatmul.bf16.gmra.mxu0 %v368
    %v553 = vpop.f32.mrf.mxu0
    %v554 = vadd.f32 %v541, %v553
    %v555 = vpop.f32.mrf.mxu0
    %556 = vdwg.mxu0
    %557 = vmatpush.bf16.msra.mxu0 %v482
    %558 = vmatpush.bf16.msra.mxu0 %v480
    %559 = vmatpush.bf16.msra.mxu0 %v478
    %560 = vmatpush.bf16.msra.mxu0 %v476
    %561 = vmatpush.bf16.msra.mxu0 %v474
    %562 = vmatpush.bf16.msra.mxu0 %v472
    %563 = vmatpush.bf16.msra.mxu0 %v470
    %564 = vmatpush.bf16.msra.mxu0 %v468
    %565 = vmatmul.bf16.gmra.mxu0 %v367
    %v566 = vpop.f32.mrf.mxu0
    %v567 = vadd.f32 %v361, %v566
    %v568 = vpop.f32.mrf.mxu0
    %569 = vdwg.mxu0
    %570 = vmatpush.bf16.msra.mxu0 %v498
    %571 = vmatpush.bf16.msra.mxu0 %v496
    %572 = vmatpush.bf16.msra.mxu0 %v494
    %573 = vmatpush.bf16.msra.mxu0 %v492
    %574 = vmatpush.bf16.msra.mxu0 %v490
    %575 = vmatpush.bf16.msra.mxu0 %v488
    %576 = vmatpush.bf16.msra.mxu0 %v486
    %577 = vmatpush.bf16.msra.mxu0 %v484
    %578 = vmatmul.bf16.gmra.mxu0 %v368
    %v579 = vpop.f32.mrf.mxu0
    %v580 = vadd.f32 %v567, %v579
    %v581 = vpop.f32.mrf.mxu0
    %582 = vdwg.mxu0
    %v583 = vmax.f32 %v554, 0.0
    %v584 = vmax.f32 %v580, 0.0
    %v585 = vld [vmem:[#allocation7] sm:$0xff]
    %v586 = vld [vmem:[#allocation7 + $0x8] sm:$0xff]
    %v587 = vld [vmem:[#allocation7 + $0x10] sm:$0xff]
    %v588 = vld [vmem:[#allocation7 + $0x18] sm:$0xff]
    %v589 = vld [vmem:[#allocation7 + $0x20] sm:$0xff]
    %v590 = vld [vmem:[#allocation7 + $0x28] sm:$0xff]
    %v591 = vld [vmem:[#allocation7 + $0x30] sm:$0xff]
    %v592 = vld [vmem:[#allocation7 + $0x38] sm:$0xff]
    %v593 = vld [vmem:[#allocation7 + $0x40] sm:$0xff]
    %v594 = vld [vmem:[#allocation7 + $0x48] sm:$0xff]
    %v595 = vld [vmem:[#allocation7 + $0x50] sm:$0xff]
    %v596 = vld [vmem:[#allocation7 + $0x58] sm:$0xff]
    %v597 = vld [vmem:[#allocation7 + $0x60] sm:$0xff]
    %v598 = vld [vmem:[#allocation7 + $0x68] sm:$0xff]
    %v599 = vld [vmem:[#allocation7 + $0x70] sm:$0xff]
    %v600 = vld [vmem:[#allocation7 + $0x78] sm:$0xff]
    %v601 = vld [vmem:[#allocation7 + $0x80] sm:$0xff]
    %v602 = vld [vmem:[#allocation7 + $0x88] sm:$0xff]
    %v603 = vld [vmem:[#allocation7 + $0x90] sm:$0xff]
    %v604 = vld [vmem:[#allocation7 + $0x98] sm:$0xff]
    %v605 = vld [vmem:[#allocation7 + $0xa0] sm:$0xff]
    %v606 = vld [vmem:[#allocation7 + $0xa8] sm:$0xff]
    %v607 = vld [vmem:[#allocation7 + $0xb0] sm:$0xff]
    %v608 = vld [vmem:[#allocation7 + $0xb8] sm:$0xff]
    %v609 = vld [vmem:[#allocation7 + $0xc0] sm:$0xff]
    %v610 = vld [vmem:[#allocation7 + $0xc8] sm:$0xff]
    %v611 = vld [vmem:[#allocation7 + $0xd0] sm:$0xff]
    %v612 = vld [vmem:[#allocation7 + $0xd8] sm:$0xff]
    %v613 = vld [vmem:[#allocation7 + $0xe0] sm:$0xff]
    %v614 = vld [vmem:[#allocation7 + $0xe8] sm:$0xff]
    %v615 = vld [vmem:[#allocation7 + $0xf0] sm:$0xff]
    %v616 = vld [vmem:[#allocation7 + $0xf8] sm:$0xff]
    %v617 = vld [vmem:[%s8] sm:$0x3]
    %v619 = vperm.slane %v617, 0
    %v620 = vperm.slane %v617, 1
    %v624 = vunpack.c.l.b16 %v325
    %v625 = vunpack.c.h.b16 %v325
    %v626 = vpack.c.b16 %v624, %v624
    %v627 = vpack.c.b16 %v625, %v625
    %v662 = vunpack.c.l.b16 %v585
    %v663 = vunpack.c.h.b16 %v585
    %v664 = vunpack.c.l.b16 %v586
    %v665 = vunpack.c.h.b16 %v586
    %v666 = vunpack.c.l.b16 %v587
    %v667 = vunpack.c.h.b16 %v587
    %v668 = vunpack.c.l.b16 %v588
    %v669 = vunpack.c.h.b16 %v588
    %v670 = vunpack.c.l.b16 %v589
    %v671 = vunpack.c.h.b16 %v589
    %v672 = vunpack.c.l.b16 %v590
    %v673 = vunpack.c.h.b16 %v590
    %v674 = vunpack.c.l.b16 %v591
    %v675 = vunpack.c.h.b16 %v591
    %v676 = vunpack.c.l.b16 %v592
    %v677 = vunpack.c.h.b16 %v592
    %v678 = vunpack.c.l.b16 %v593
    %v679 = vunpack.c.h.b16 %v593
    %v680 = vunpack.c.l.b16 %v594
    %v681 = vunpack.c.h.b16 %v594
    %v682 = vunpack.c.l.b16 %v595
    %v683 = vunpack.c.h.b16 %v595
    %v684 = vunpack.c.l.b16 %v596
    %v685 = vunpack.c.h.b16 %v596
    %v686 = vunpack.c.l.b16 %v597
    %v687 = vunpack.c.h.b16 %v597
    %v688 = vunpack.c.l.b16 %v598
    %v689 = vunpack.c.h.b16 %v598
    %v690 = vunpack.c.l.b16 %v599
    %v691 = vunpack.c.h.b16 %v599
    %v692 = vunpack.c.l.b16 %v600
    %v693 = vunpack.c.h.b16 %v600
    %v694 = vunpack.c.l.b16 %v601
    %v695 = vunpack.c.h.b16 %v601
    %v696 = vunpack.c.l.b16 %v602
    %v697 = vunpack.c.h.b16 %v602
    %v698 = vunpack.c.l.b16 %v603
    %v699 = vunpack.c.h.b16 %v603
    %v700 = vunpack.c.l.b16 %v604
    %v701 = vunpack.c.h.b16 %v604
    %v702 = vunpack.c.l.b16 %v605
    %v703 = vunpack.c.h.b16 %v605
    %v704 = vunpack.c.l.b16 %v606
    %v705 = vunpack.c.h.b16 %v606
    %v706 = vunpack.c.l.b16 %v607
    %v707 = vunpack.c.h.b16 %v607
    %v708 = vunpack.c.l.b16 %v608
    %v709 = vunpack.c.h.b16 %v608
    %v710 = vunpack.c.l.b16 %v609
    %v711 = vunpack.c.h.b16 %v609
    %v712 = vunpack.c.l.b16 %v610
    %v713 = vunpack.c.h.b16 %v610
    %v714 = vunpack.c.l.b16 %v611
    %v715 = vunpack.c.h.b16 %v611
    %v716 = vunpack.c.l.b16 %v612
    %v717 = vunpack.c.h.b16 %v612
    %v718 = vunpack.c.l.b16 %v613
    %v719 = vunpack.c.h.b16 %v613
    %v720 = vunpack.c.l.b16 %v614
    %v721 = vunpack.c.h.b16 %v614
    %v722 = vunpack.c.l.b16 %v615
    %v723 = vunpack.c.h.b16 %v615
    %v724 = vunpack.c.l.b16 %v616
    %v725 = vunpack.c.h.b16 %v616
    %v726 = vpack.c.b16 %v664, %v662
    %v727 = vpack.c.b16 %v665, %v663
    %v728 = vpack.c.b16 %v668, %v666
    %v729 = vpack.c.b16 %v669, %v667
    %v730 = vpack.c.b16 %v672, %v670
    %v731 = vpack.c.b16 %v673, %v671
    %v732 = vpack.c.b16 %v676, %v674
    %v733 = vpack.c.b16 %v677, %v675
    %v734 = vpack.c.b16 %v680, %v678
    %v735 = vpack.c.b16 %v681, %v679
    %v736 = vpack.c.b16 %v684, %v682
    %v737 = vpack.c.b16 %v685, %v683
    %v738 = vpack.c.b16 %v688, %v686
    %v739 = vpack.c.b16 %v689, %v687
    %v740 = vpack.c.b16 %v692, %v690
    %v741 = vpack.c.b16 %v693, %v691
    %v742 = vpack.c.b16 %v696, %v694
    %v743 = vpack.c.b16 %v697, %v695
    %v744 = vpack.c.b16 %v700, %v698
    %v745 = vpack.c.b16 %v701, %v699
    %v746 = vpack.c.b16 %v704, %v702
    %v747 = vpack.c.b16 %v705, %v703
    %v748 = vpack.c.b16 %v708, %v706
    %v749 = vpack.c.b16 %v709, %v707
    %v750 = vpack.c.b16 %v712, %v710
    %v751 = vpack.c.b16 %v713, %v711
    %v752 = vpack.c.b16 %v716, %v714
    %v753 = vpack.c.b16 %v717, %v715
    %v754 = vpack.c.b16 %v720, %v718
    %v755 = vpack.c.b16 %v721, %v719
    %v756 = vpack.c.b16 %v724, %v722
    %v757 = vpack.c.b16 %v725, %v723
    %790 = vmatpush.bf16.msra.mxu0 %v740
    %791 = vmatpush.bf16.msra.mxu0 %v738
    %792 = vmatpush.bf16.msra.mxu0 %v736
    %793 = vmatpush.bf16.msra.mxu0 %v734
    %794 = vmatpush.bf16.msra.mxu0 %v732
    %795 = vmatpush.bf16.msra.mxu0 %v730
    %796 = vmatpush.bf16.msra.mxu0 %v728
    %797 = vmatpush.bf16.msra.mxu0 %v726
    %798 = vmatmul.bf16.gmra.mxu0 %v626
    %v799 = vpop.f32.mrf.mxu0
    %v800 = vadd.f32 %v619, %v799
    %v801 = vpop.f32.mrf.mxu0
    %802 = vdwg.mxu0
    %803 = vmatpush.bf16.msra.mxu0 %v756
    %804 = vmatpush.bf16.msra.mxu0 %v754
    %805 = vmatpush.bf16.msra.mxu0 %v752
    %806 = vmatpush.bf16.msra.mxu0 %v750
    %807 = vmatpush.bf16.msra.mxu0 %v748
    %808 = vmatpush.bf16.msra.mxu0 %v746
    %809 = vmatpush.bf16.msra.mxu0 %v744
    %810 = vmatpush.bf16.msra.mxu0 %v742
    %811 = vmatmul.bf16.gmra.mxu0 %v627
    %v812 = vpop.f32.mrf.mxu0
    %v813 = vadd.f32 %v800, %v812
    %v814 = vpop.f32.mrf.mxu0
    %815 = vdwg.mxu0
    %816 = vmatpush.bf16.msra.mxu0 %v741
    %817 = vmatpush.bf16.msra.mxu0 %v739
    %818 = vmatpush.bf16.msra.mxu0 %v737
    %819 = vmatpush.bf16.msra.mxu0 %v735
    %820 = vmatpush.bf16.msra.mxu0 %v733
    %821 = vmatpush.bf16.msra.mxu0 %v731
    %822 = vmatpush.bf16.msra.mxu0 %v729
    %823 = vmatpush.bf16.msra.mxu0 %v727
    %824 = vmatmul.bf16.gmra.mxu0 %v626
    %v825 = vpop.f32.mrf.mxu0
    %v826 = vadd.f32 %v620, %v825
    %v827 = vpop.f32.mrf.mxu0
    %828 = vdwg.mxu0
    %829 = vmatpush.bf16.msra.mxu0 %v757
    %830 = vmatpush.bf16.msra.mxu0 %v755
    %831 = vmatpush.bf16.msra.mxu0 %v753
    %832 = vmatpush.bf16.msra.mxu0 %v751
    %833 = vmatpush.bf16.msra.mxu0 %v749
    %834 = vmatpush.bf16.msra.mxu0 %v747
    %835 = vmatpush.bf16.msra.mxu0 %v745
    %836 = vmatpush.bf16.msra.mxu0 %v743
    %837 = vmatmul.bf16.gmra.mxu0 %v627
    %v838 = vpop.f32.mrf.mxu0
    %v839 = vadd.f32 %v826, %v838
    %v840 = vpop.f32.mrf.mxu0
    %841 = vdwg.mxu0
    %v842 = vmax.f32 %v813, 0.0
    %v843 = vmax.f32 %v839, 0.0
    %v844 = vld [vmem:[%s9] sm:$0x3]
    %v846 = vperm.slane %v844, 0
    %v847 = vperm.slane %v844, 1
    %v850 = vmul.f32 %v583, %v846
    %v851 = vmul.f32 %v584, %v847
    %v852 = vadd.f32 %v850, %v851
    %853 = vadd.xlane.f32.xlu0 %v852
    %v854 = vpop.xlane.xlu0 %853
    %v855 = vld [vmem:[%s10] sm:$0x3]
    %v857 = vperm.slane %v855, 0
    %v858 = vperm.slane %v855, 1
    %v861 = vmul.f32 %v842, %v857
    %v862 = vmul.f32 %v843, %v858
    %v863 = vadd.f32 %v861, %v862
    %864 = vadd.xlane.f32.xlu0 %v863
    %v865 = vpop.xlane.xlu0 %864
    %v866 = vlaneseq
    %v867 = vand.u32 %v866, 127
    %vm868 = vcmp.eq.s32.totalorder %v867, 0
    %v869 = vsel %vm868, %v854, %v865
    %v870 = vld [vmem:[%s11] sm:$0x1]
    %v872 = vperm.slane %v870, 0
    %v874 = vadd.f32 %v869, %v872
    %vm875 = vcmask 15360
    %876 = vst.msk [vmem:[%s12] sm:$0xff] %vm875, %v874
    // Predicated region
    $region66: #{tpu_custom_call.1} parent=1 // pred_check
      _
    $region67: #{tpu_custom_call.1} parent=1 // pred_check_branch
      %878 = sbr.rel (0) target = $region69
    $region68: #{tpu_custom_call.1} parent=1 // pred_region
      _
    $region69: #{tpu_custom_call.1} parent=1 // pred_fallthru
      _
    // Predicated region
    $region70: #{tpu_custom_call.1} parent=1 // pred_check
      _
    $region71: #{tpu_custom_call.1} parent=1 // pred_check_branch
      %880 = sbr.rel (0) target = $region73
    $region72: #{tpu_custom_call.1} parent=1 // pred_region
      _
    $region73: #{tpu_custom_call.1} parent=1 // pred_fallthru
      _
    %881 = vsyncpa [#allocation3], 1
    %882 = vsyncpa [#allocation5], 1
    %883 = vsyncpa [#allocation8], 1

// kernel: tpu_custom_call.1
$region0: #{tpu_custom_call.1}
  #allocation0 [shape = 'u32[]', space=smem, size = 0x4, offset = 0x4, fixed_abs, tag = 'smem constant byte address 0x4 - core index']
  #allocation1 [shape = 'u32[72,128]{1,0:T(1,128)}', space=vmem, size = 0x9000, scoped, tag = 'internal scratch']
  %s0 = inlined_call_operand.vmem [shape: f32[8,16], index: 0, kind: input, shape index: {}]
  %s1 = inlined_call_operand.vmem [shape: f32[8,4], index: 1, kind: input, shape index: {}]
  %s2 = inlined_call_operand.hbm [shape: f32[16,512], index: 2, kind: input, shape index: {}]
  %s3 = inlined_call_operand.hbm [shape: f32[4,512], index: 3, kind: input, shape index: {}]
  %s4 = inlined_call_operand.vmem [shape: f32[1,512], index: 4, kind: input, shape index: {}]
  %s5 = inlined_call_operand.hbm [shape: bf16[256,256], index: 5, kind: input, shape index: {}]
  %s6 = inlined_call_operand.vmem [shape: f32[1,256], index: 6, kind: input, shape index: {}]
  %s7 = inlined_call_operand.hbm [shape: bf16[256,256], index: 7, kind: input, shape index: {}]
  %s8 = inlined_call_operand.vmem [shape: f32[1,256], index: 8, kind: input, shape index: {}]
  %s9 = inlined_call_operand.vmem [shape: f32[1,256], index: 9, kind: input, shape index: {}]
  %s10 = inlined_call_operand.vmem [shape: f32[1,256], index: 10, kind: input, shape index: {}]
  %s11 = inlined_call_operand.vmem [shape: f32[1,2], index: 11, kind: input, shape index: {}]
  %s12 = inlined_call_operand.vmem [shape: f32[8,2], index: 12, kind: output, shape index: {}]
  %s13 = sld [smem:[#allocation0]]
  $region74: #{tpu_custom_call.1} parent=0
    _
  %s15 = ssub.s32 1, %s13
  %s16 = scalar_select 0, %s15, %s13
  $region1: #{tpu_custom_call.1} parent=0
    #allocation2 [shape = 'u8[32768]{0}', space=vmem, size = 0x8000, scoped, tag = 'input window, operand 2, single buffered']
    #allocation3 [shape = 's32[1]{0}', space=sflag, size = 0x4, scoped, tag = 'scoped memory for tpu_custom_call.1']
    #allocation4 [shape = 'u8[8192]{0}', space=vmem, size = 0x2000, scoped, tag = 'input window, operand 3, single buffered']
    #allocation5 [shape = 's32[1]{0}', space=sflag, size = 0x4, scoped, tag = 'scoped memory for tpu_custom_call.1']
    #allocation6 [shape = 'u8[131072]{0}', space=vmem, size = 0x20000, scoped, tag = 'input window, operand 5, single buffered']
    #allocation7 [shape = 'u8[131072]{0}', space=vmem, size = 0x20000, scoped, tag = 'input window, operand 7, single buffered']
    #allocation8 [shape = 's32[1]{0}', space=sflag, size = 0x4, scoped, tag = 'scoped memory for tpu_custom_call.1']
    %17 = vsyncpa [#allocation3], 0
    %18 = vsyncpa [#allocation5], 0
    %19 = vsyncpa [#allocation8], 0
    // Predicated region
    $region2: #{tpu_custom_call.1} parent=1 // pred_check
      _
    $region3: #{tpu_custom_call.1} parent=1 // pred_check_branch
      %21 = sbr.rel (0) target = $region5
    $region4: #{tpu_custom_call.1} parent=1 // pred_region
      _
    $region5: #{tpu_custom_call.1} parent=1 // pred_fallthru
      _
    // Predicated region
    $region6: #{tpu_custom_call.1} parent=1 // pred_check
      _
    $region7: #{tpu_custom_call.1} parent=1 // pred_check_branch
      %23 = sbr.rel (0) target = $region9
    $region8: #{tpu_custom_call.1} parent=1 // pred_region
      _
    $region9: #{tpu_custom_call.1} parent=1 // pred_fallthru
      _
    // Predicated region
    $region10: #{tpu_custom_call.1} parent=1 // pred_check
      _
    $region11: #{tpu_custom_call.1} parent=1 // pred_check_branch
      %25 = sbr.rel (0) target = $region13
    $region12: #{tpu_custom_call.1} parent=1 // pred_region
      %27 = vsyncadd [#allocation3], 0
      %s28 = sshll.u32 %s2, 4
      %s29 = int_to_ptr.hbm [resolvable:$true] %s28
      %s30 = sshll.u32 [#allocation2], 4
      %s31 = int_to_ptr.vmem [resolvable:$true] %s30
      %36 = dma.hbm_to_vmem [thread:$0]  %s29, 1024, %s31, [#allocation3], 512, 512, 32
    $region13: #{tpu_custom_call.1} parent=1 // pred_fallthru
      _
    // Predicated region
    $region14: #{tpu_custom_call.1} parent=1 // pred_check
      _
    $region15: #{tpu_custom_call.1} parent=1 // pred_check_branch
      %38 = sbr.rel (0) target = $region17
    $region16: #{tpu_custom_call.1} parent=1 // pred_region
      %40 = vsyncadd [#allocation5], 0
      %s42 = sshll.u32 %s3, 4
      %s43 = int_to_ptr.hbm [resolvable:$true] %s42
      %s44 = sshll.u32 [#allocation4], 4
      %s45 = int_to_ptr.vmem [resolvable:$true] %s44
      %47 = dma.hbm_to_vmem [thread:$0]  %s43, 256, %s45, [#allocation5]
    $region17: #{tpu_custom_call.1} parent=1 // pred_fallthru
      _
    // Predicated region
    $region18: #{tpu_custom_call.1} parent=1 // pred_check
      _
    $region19: #{tpu_custom_call.1} parent=1 // pred_check_branch
      %49 = sbr.rel (0) target = $region21
    $region20: #{tpu_custom_call.1} parent=1 // pred_region
      _
    $region21: #{tpu_custom_call.1} parent=1 // pred_fallthru
      _
    // Predicated region
    $region22: #{tpu_custom_call.1} parent=1 // pred_check
      _
    $region23: #{tpu_custom_call.1} parent=1 // pred_check_branch
      %51 = sbr.rel (0) target = $region25
    $region24: #{tpu_custom_call.1} parent=1 // pred_region
      %53 = vsyncadd [#allocation5], 0
      %s54 = sshll.u32 %s5, 4
      %s55 = int_to_ptr.hbm [resolvable:$true] %s54
      %s56 = sshll.u32 [#allocation6], 4
      %s57 = int_to_ptr.vmem [resolvable:$true] %s56
      %62 = dma.hbm_to_vmem [thread:$0]  %s55, 4096, %s57, [#allocation5], 128, 128, 8
    $region25: #{tpu_custom_call.1} parent=1 // pred_fallthru
      _
    // Predicated region
    $region26: #{tpu_custom_call.1} parent=1 // pred_check
      _
    $region27: #{tpu_custom_call.1} parent=1 // pred_check_branch
      %64 = sbr.rel (0) target = $region29
    $region28: #{tpu_custom_call.1} parent=1 // pred_region
      _
    $region29: #{tpu_custom_call.1} parent=1 // pred_fallthru
      _
    // Predicated region
    $region30: #{tpu_custom_call.1} parent=1 // pred_check
      _
    $region31: #{tpu_custom_call.1} parent=1 // pred_check_branch
      %66 = sbr.rel (0) target = $region33
    $region32: #{tpu_custom_call.1} parent=1 // pred_region
      %68 = vsyncadd [#allocation8], 0
      %s69 = sshll.u32 %s7, 4
      %s70 = int_to_ptr.hbm [resolvable:$true] %s69
      %s71 = sshll.u32 [#allocation7], 4
      %s72 = int_to_ptr.vmem [resolvable:$true] %s71
      %77 = dma.hbm_to_vmem [thread:$0]  %s70, 4096, %s72, [#allocation8], 128, 128, 8
    $region33: #{tpu_custom_call.1} parent=1 // pred_fallthru
      _
    // Predicated region
    $region34: #{tpu_custom_call.1} parent=1 // pred_check
      _
    $region35: #{tpu_custom_call.1} parent=1 // pred_check_branch
      %79 = sbr.rel (0) target = $region37
    $region36: #{tpu_custom_call.1} parent=1 // pred_region
      _
    $region37: #{tpu_custom_call.1} parent=1 // pred_fallthru
      _
    // Predicated region
    $region38: #{tpu_custom_call.1} parent=1 // pred_check
      _
    $region39: #{tpu_custom_call.1} parent=1 // pred_check_branch
      %81 = sbr.rel (0) target = $region41
    $region40: #{tpu_custom_call.1} parent=1 // pred_region
      _
    $region41: #{tpu_custom_call.1} parent=1 // pred_fallthru
      _
    // Predicated region
    $region42: #{tpu_custom_call.1} parent=1 // pred_check
      _
    $region43: #{tpu_custom_call.1} parent=1 // pred_check_branch
      %83 = sbr.rel (0) target = $region45
    $region44: #{tpu_custom_call.1} parent=1 // pred_region
      _
    $region45: #{tpu_custom_call.1} parent=1 // pred_fallthru
      _
    // Predicated region
    $region46: #{tpu_custom_call.1} parent=1 // pred_check
      _
    $region47: #{tpu_custom_call.1} parent=1 // pred_check_branch
      %85 = sbr.rel (0) target = $region49
    $region48: #{tpu_custom_call.1} parent=1 // pred_region
      _
    $region49: #{tpu_custom_call.1} parent=1 // pred_fallthru
      _
    // Predicated region
    $region50: #{tpu_custom_call.1} parent=1 // pred_check
      _
    $region51: #{tpu_custom_call.1} parent=1 // pred_check_branch
      %87 = sbr.rel (0) target = $region53
    $region52: #{tpu_custom_call.1} parent=1 // pred_region
      %89 = dma.done [#allocation3], 1024
    $region53: #{tpu_custom_call.1} parent=1 // pred_fallthru
      _
    // Predicated region
    $region54: #{tpu_custom_call.1} parent=1 // pred_check
      _
    $region55: #{tpu_custom_call.1} parent=1 // pred_check_branch
      %91 = sbr.rel (0) target = $region57
    $region56: #{tpu_custom_call.1} parent=1 // pred_region
      %93 = dma.done [#allocation5], 256
    $region57: #{tpu_custom_call.1} parent=1 // pred_fallthru
      _
    // Predicated region
    $region58: #{tpu_custom_call.1} parent=1 // pred_check
      _
    $region59: #{tpu_custom_call.1} parent=1 // pred_check_branch
      %95 = sbr.rel (0) target = $region61
    $region60: #{tpu_custom_call.1} parent=1 // pred_region
      %97 = dma.done [#allocation5], 4096
    $region61: #{tpu_custom_call.1} parent=1 // pred_fallthru
      _
    // Predicated region
    $region62: #{tpu_custom_call.1} parent=1 // pred_check
      _
    $region63: #{tpu_custom_call.1} parent=1 // pred_check_branch
      %99 = sbr.rel (0) target = $region65
    $region64: #{tpu_custom_call.1} parent=1 // pred_region
      %101 = dma.done [#allocation8], 4096
    $region65: #{tpu_custom_call.1} parent=1 // pred_fallthru
      _
    %v102 = vld [vmem:[%s0] sm:$0xff]
    %v103 = vld [vmem:[%s1] sm:$0xff]
    %v104 = vld [vmem:[#allocation2] sm:$0xff]
    %v105 = vld [vmem:[#allocation2 + $0x8] sm:$0xff]
    %v106 = vld [vmem:[#allocation2 + $0x10] sm:$0xff]
    %v107 = vld [vmem:[#allocation2 + $0x18] sm:$0xff]
    %v108 = vld [vmem:[#allocation2 + $0x20] sm:$0xff]
    %v109 = vld [vmem:[#allocation2 + $0x28] sm:$0xff]
    %v110 = vld [vmem:[#allocation2 + $0x30] sm:$0xff]
    %v111 = vld [vmem:[#allocation2 + $0x38] sm:$0xff]
    %v112 = vld [vmem:[#allocation4] sm:$0xff]
    %v113 = vld [vmem:[#allocation4 + $0x8] sm:$0xff]
    %116 = vst [vmem:[#allocation1] ss:$2 sm:$0xff] %v112
    %s117 = scalar_lea.vmem [#allocation1], 16
    %118 = vst [vmem:[%s117] ss:$2 sm:$0xff] %v113
    %v119 = vld.sshfl [vmem:[#allocation1] sm:$0xff pattern:$0x75316420]
    %v120 = vld.sshfl [vmem:[#allocation1 + $0x8] sm:$0xff pattern:$0x75316420]
    %v121 = vld.sshfl [vmem:[#allocation1 + $0x10] sm:$0xff pattern:$0x75316420]
    %v122 = vld.sshfl [vmem:[#allocation1 + $0x18] sm:$0xff pattern:$0x75316420]
    %vm123 = vcmask 31744
    %v125 = vsel %vm123, %v103, 0
    %vm127 = vcmask 1043456
    %v128 = vsel %vm127, %v119, 0
    %v130 = vsel %vm127, %v120, 0
    %v132 = vsel %vm127, %v121, 0
    %v134 = vsel %vm127, %v122, 0
    %136 = vmatpush.msra.mxu0 0.0
    %137 = vmatpush.msra.mxu0 0.0
    %138 = vmatpush.msra.mxu0 0.0
    %139 = vmatpush.msra.mxu0 0.0
    %140 = vmatpush.msra.mxu0 0.0
    %141 = vmatpush.msra.mxu0 0.0
    %142 = vmatpush.msra.mxu0 0.0
    %143 = vmatpush.msra.mxu0 0.0
    %144 = vmatpush.msra.mxu0 0.0
    %145 = vmatpush.msra.mxu0 0.0
    %146 = vmatpush.msra.mxu0 0.0
    %147 = vmatpush.msra.mxu0 0.0
    %148 = vmatpush.msra.mxu0 0.0
    %149 = vmatpush.msra.mxu0 0.0
    %150 = vmatpush.msra.mxu0 0.0
    %151 = vmatpush.msra.mxu0 %v128
    %152 = vmatmul.f32.gmra.mxu0 %v125
    %v153 = vpop.f32.mrf.mxu0
    %v154 = vadd.f32 0.0, %v153
    %155 = vdwg.mxu0
    %156 = vmatpush.msra.mxu0 0.0
    %157 = vmatpush.msra.mxu0 0.0
    %158 = vmatpush.msra.mxu0 0.0
    %159 = vmatpush.msra.mxu0 0.0
    %160 = vmatpush.msra.mxu0 0.0
    %161 = vmatpush.msra.mxu0 0.0
    %162 = vmatpush.msra.mxu0 0.0
    %163 = vmatpush.msra.mxu0 0.0
    %164 = vmatpush.msra.mxu0 0.0
    %165 = vmatpush.msra.mxu0 0.0
    %166 = vmatpush.msra.mxu0 0.0
    %167 = vmatpush.msra.mxu0 0.0
    %168 = vmatpush.msra.mxu0 0.0
    %169 = vmatpush.msra.mxu0 0.0
    %170 = vmatpush.msra.mxu0 0.0
    %171 = vmatpush.msra.mxu0 %v130
    %172 = vmatmul.f32.gmra.mxu0 %v125
    %v173 = vpop.f32.mrf.mxu0
    %v174 = vadd.f32 0.0, %v173
    %175 = vdwg.mxu0
    %176 = vmatpush.msra.mxu0 0.0
    %177 = vmatpush.msra.mxu0 0.0
    %178 = vmatpush.msra.mxu0 0.0
    %179 = vmatpush.msra.mxu0 0.0
    %180 = vmatpush.msra.mxu0 0.0
    %181 = vmatpush.msra.mxu0 0.0
    %182 = vmatpush.msra.mxu0 0.0
    %183 = vmatpush.msra.mxu0 0.0
    %184 = vmatpush.msra.mxu0 0.0
    %185 = vmatpush.msra.mxu0 0.0
    %186 = vmatpush.msra.mxu0 0.0
    %187 = vmatpush.msra.mxu0 0.0
    %188 = vmatpush.msra.mxu0 0.0
    %189 = vmatpush.msra.mxu0 0.0
    %190 = vmatpush.msra.mxu0 0.0
    %191 = vmatpush.msra.mxu0 %v132
    %192 = vmatmul.f32.gmra.mxu0 %v125
    %v193 = vpop.f32.mrf.mxu0
    %v194 = vadd.f32 0.0, %v193
    %195 = vdwg.mxu0
    %196 = vmatpush.msra.mxu0 0.0
    %197 = vmatpush.msra.mxu0 0.0
    %198 = vmatpush.msra.mxu0 0.0
    %199 = vmatpush.msra.mxu0 0.0
    %200 = vmatpush.msra.mxu0 0.0
    %201 = vmatpush.msra.mxu0 0.0
    %202 = vmatpush.msra.mxu0 0.0
    %203 = vmatpush.msra.mxu0 0.0
    %204 = vmatpush.msra.mxu0 0.0
    %205 = vmatpush.msra.mxu0 0.0
    %206 = vmatpush.msra.mxu0 0.0
    %207 = vmatpush.msra.mxu0 0.0
    %208 = vmatpush.msra.mxu0 0.0
    %209 = vmatpush.msra.mxu0 0.0
    %210 = vmatpush.msra.mxu0 0.0
    %211 = vmatpush.msra.mxu0 %v134
    %212 = vmatmul.f32.gmra.mxu0 %v125
    %v213 = vpop.f32.mrf.mxu0
    %v214 = vadd.f32 0.0, %v213
    %215 = vdwg.mxu0
    %vm216 = vcmask 130048
    %v218 = vsel %vm216, %v102, 0
    %220 = vmatpush.msra.mxu0 0.0
    %221 = vmatpush.msra.mxu0 0.0
    %222 = vmatpush.msra.mxu0 0.0
    %223 = vmatpush.msra.mxu0 0.0
    %224 = vmatpush.msra.mxu0 0.0
    %225 = vmatpush.msra.mxu0 0.0
    %226 = vmatpush.msra.mxu0 0.0
    %227 = vmatpush.msra.mxu0 0.0
    %228 = vmatpush.msra.mxu0 0.0
    %229 = vmatpush.msra.mxu0 0.0
    %230 = vmatpush.msra.mxu0 0.0
    %231 = vmatpush.msra.mxu0 0.0
    %232 = vmatpush.msra.mxu0 0.0
    %233 = vmatpush.msra.mxu0 0.0
    %234 = vmatpush.msra.mxu0 %v108
    %235 = vmatpush.msra.mxu0 %v104
    %236 = vmatmul.f32.gmra.mxu0 %v218
    %v237 = vpop.f32.mrf.mxu0
    %v238 = vadd.f32 %v154, %v237
    %239 = vdwg.mxu0
    %240 = vmatpush.msra.mxu0 0.0
    %241 = vmatpush.msra.mxu0 0.0
    %242 = vmatpush.msra.mxu0 0.0
    %243 = vmatpush.msra.mxu0 0.0
    %244 = vmatpush.msra.mxu0 0.0
    %245 = vmatpush.msra.mxu0 0.0
    %246 = vmatpush.msra.mxu0 0.0
    %247 = vmatpush.msra.mxu0 0.0
    %248 = vmatpush.msra.mxu0 0.0
    %249 = vmatpush.msra.mxu0 0.0
    %250 = vmatpush.msra.mxu0 0.0
    %251 = vmatpush.msra.mxu0 0.0
    %252 = vmatpush.msra.mxu0 0.0
    %253 = vmatpush.msra.mxu0 0.0
    %254 = vmatpush.msra.mxu0 %v109
    %255 = vmatpush.msra.mxu0 %v105
    %256 = vmatmul.f32.gmra.mxu0 %v218
    %v257 = vpop.f32.mrf.mxu0
    %v258 = vadd.f32 %v174, %v257
    %259 = vdwg.mxu0
    %260 = vmatpush.msra.mxu0 0.0
    %261 = vmatpush.msra.mxu0 0.0
    %262 = vmatpush.msra.mxu0 0.0
    %263 = vmatpush.msra.mxu0 0.0
    %264 = vmatpush.msra.mxu0 0.0
    %265 = vmatpush.msra.mxu0 0.0
    %266 = vmatpush.msra.mxu0 0.0
    %267 = vmatpush.msra.mxu0 0.0
    %268 = vmatpush.msra.mxu0 0.0
    %269 = vmatpush.msra.mxu0 0.0
    %270 = vmatpush.msra.mxu0 0.0
    %271 = vmatpush.msra.mxu0 0.0
    %272 = vmatpush.msra.mxu0 0.0
    %273 = vmatpush.msra.mxu0 0.0
    %274 = vmatpush.msra.mxu0 %v110
    %275 = vmatpush.msra.mxu0 %v106
    %276 = vmatmul.f32.gmra.mxu0 %v218
    %v277 = vpop.f32.mrf.mxu0
    %v278 = vadd.f32 %v194, %v277
    %279 = vdwg.mxu0
    %280 = vmatpush.msra.mxu0 0.0
    %281 = vmatpush.msra.mxu0 0.0
    %282 = vmatpush.msra.mxu0 0.0
    %283 = vmatpush.msra.mxu0 0.0
    %284 = vmatpush.msra.mxu0 0.0
    %285 = vmatpush.msra.mxu0 0.0
    %286 = vmatpush.msra.mxu0 0.0
    %287 = vmatpush.msra.mxu0 0.0
    %288 = vmatpush.msra.mxu0 0.0
    %289 = vmatpush.msra.mxu0 0.0
    %290 = vmatpush.msra.mxu0 0.0
    %291 = vmatpush.msra.mxu0 0.0
    %292 = vmatpush.msra.mxu0 0.0
    %293 = vmatpush.msra.mxu0 0.0
    %294 = vmatpush.msra.mxu0 %v111
    %295 = vmatpush.msra.mxu0 %v107
    %296 = vmatmul.f32.gmra.mxu0 %v218
    %v297 = vpop.f32.mrf.mxu0
    %v298 = vadd.f32 %v214, %v297
    %299 = vdwg.mxu0
    %v300 = vld [vmem:[%s4] sm:$0xf]
    %v302 = vperm.slane %v300, 0
    %v303 = vperm.slane %v300, 1
    %v304 = vperm.slane %v300, 2
    %v305 = vperm.slane %v300, 3
    %v310 = vadd.f32 %v238, %v302
    %v311 = vadd.f32 %v258, %v303
    %v312 = vadd.f32 %v278, %v304
    %v313 = vadd.f32 %v298, %v305
    %v314 = vpack.c.bf16 %v311, %v310
    %v315 = vpack.c.bf16 %v313, %v312
    %v316 = vunpack.c.l.bf16 %v314
    %v317 = vunpack.c.h.bf16 %v314
    %v318 = vunpack.c.l.bf16 %v315
    %v319 = vunpack.c.h.bf16 %v315
    %v320 = vmax.f32 %v316, 0.0
    %v321 = vmax.f32 %v317, 0.0
    %v322 = vmax.f32 %v318, 0.0
    %v323 = vmax.f32 %v319, 0.0
    %v324 = vpack.c.bf16 %v321, %v320
    %v325 = vpack.c.bf16 %v323, %v322
    %v326 = vld [vmem:[#allocation6] sm:$0xff]
    %v327 = vld [vmem:[#allocation6 + $0x8] sm:$0xff]
    %v328 = vld [vmem:[#allocation6 + $0x10] sm:$0xff]
    %v329 = vld [vmem:[#allocation6 + $0x18] sm:$0xff]
    %v330 = vld [vmem:[#allocation6 + $0x20] sm:$0xff]
    %v331 = vld [vmem:[#allocation6 + $0x28] sm:$0xff]
    %v332 = vld [vmem:[#allocation6 + $0x30] sm:$0xff]
    %v333 = vld [vmem:[#allocation6 + $0x38] sm:$0xff]
    %v334 = vld [vmem:[#allocation6 + $0x40] sm:$0xff]
    %v335 = vld [vmem:[#allocation6 + $0x48] sm:$0xff]
    %v336 = vld [vmem:[#allocation6 + $0x50] sm:$0xff]
    %v337 = vld [vmem:[#allocation6 + $0x58] sm:$0xff]
    %v338 = vld [vmem:[#allocation6 + $0x60] sm:$0xff]
    %v339 = vld [vmem:[#allocation6 + $0x68] sm:$0xff]
    %v340 = vld [vmem:[#allocation6 + $0x70] sm:$0xff]
    %v341 = vld [vmem:[#allocation6 + $0x78] sm:$0xff]
    %v342 = vld [vmem:[#allocation6 + $0x80] sm:$0xff]
    %v343 = vld [vmem:[#allocation6 + $0x88] sm:$0xff]
    %v344 = vld [vmem:[#allocation6 + $0x90] sm:$0xff]
    %v345 = vld [vmem:[#allocation6 + $0x98] sm:$0xff]
    %v346 = vld [vmem:[#allocation6 + $0xa0] sm:$0xff]
    %v347 = vld [vmem:[#allocation6 + $0xa8] sm:$0xff]
    %v348 = vld [vmem:[#allocation6 + $0xb0] sm:$0xff]
    %v349 = vld [vmem:[#allocation6 + $0xb8] sm:$0xff]
    %v350 = vld [vmem:[#allocation6 + $0xc0] sm:$0xff]
    %v351 = vld [vmem:[#allocation6 + $0xc8] sm:$0xff]
    %v352 = vld [vmem:[#allocation6 + $0xd0] sm:$0xff]
    %v353 = vld [vmem:[#allocation6 + $0xd8] sm:$0xff]
    %v354 = vld [vmem:[#allocation6 + $0xe0] sm:$0xff]
    %v355 = vld [vmem:[#allocation6 + $0xe8] sm:$0xff]
    %v356 = vld [vmem:[#allocation6 + $0xf0] sm:$0xff]
    %v357 = vld [vmem:[#allocation6 + $0xf8] sm:$0xff]
    %v358 = vld [vmem:[%s6] sm:$0x3]
    %v360 = vperm.slane %v358, 0
    %v361 = vperm.slane %v358, 1
    %v365 = vunpack.c.l.b16 %v324
    %v366 = vunpack.c.h.b16 %v324
    %v367 = vpack.c.b16 %v365, %v365
    %v368 = vpack.c.b16 %v366, %v366
    %v403 = vunpack.c.l.b16 %v326
    %v404 = vunpack.c.h.b16 %v326
    %v405 = vunpack.c.l.b16 %v327
    %v406 = vunpack.c.h.b16 %v327
    %v407 = vunpack.c.l.b16 %v328
    %v408 = vunpack.c.h.b16 %v328
    %v409 = vunpack.c.l.b16 %v329
    %v410 = vunpack.c.h.b16 %v329
    %v411 = vunpack.c.l.b16 %v330
    %v412 = vunpack.c.h.b16 %v330
    %v413 = vunpack.c.l.b16 %v331
    %v414 = vunpack.c.h.b16 %v331
    %v415 = vunpack.c.l.b16 %v332
    %v416 = vunpack.c.h.b16 %v332
    %v417 = vunpack.c.l.b16 %v333
    %v418 = vunpack.c.h.b16 %v333
    %v419 = vunpack.c.l.b16 %v334
    %v420 = vunpack.c.h.b16 %v334
    %v421 = vunpack.c.l.b16 %v335
    %v422 = vunpack.c.h.b16 %v335
    %v423 = vunpack.c.l.b16 %v336
    %v424 = vunpack.c.h.b16 %v336
    %v425 = vunpack.c.l.b16 %v337
    %v426 = vunpack.c.h.b16 %v337
    %v427 = vunpack.c.l.b16 %v338
    %v428 = vunpack.c.h.b16 %v338
    %v429 = vunpack.c.l.b16 %v339
    %v430 = vunpack.c.h.b16 %v339
    %v431 = vunpack.c.l.b16 %v340
    %v432 = vunpack.c.h.b16 %v340
    %v433 = vunpack.c.l.b16 %v341
    %v434 = vunpack.c.h.b16 %v341
    %v435 = vunpack.c.l.b16 %v342
    %v436 = vunpack.c.h.b16 %v342
    %v437 = vunpack.c.l.b16 %v343
    %v438 = vunpack.c.h.b16 %v343
    %v439 = vunpack.c.l.b16 %v344
    %v440 = vunpack.c.h.b16 %v344
    %v441 = vunpack.c.l.b16 %v345
    %v442 = vunpack.c.h.b16 %v345
    %v443 = vunpack.c.l.b16 %v346
    %v444 = vunpack.c.h.b16 %v346
    %v445 = vunpack.c.l.b16 %v347
    %v446 = vunpack.c.h.b16 %v347
    %v447 = vunpack.c.l.b16 %v348
    %v448 = vunpack.c.h.b16 %v348
    %v449 = vunpack.c.l.b16 %v349
    %v450 = vunpack.c.h.b16 %v349
    %v451 = vunpack.c.l.b16 %v350
    %v452 = vunpack.c.h.b16 %v350
    %v453 = vunpack.c.l.b16 %v351
    %v454 = vunpack.c.h.b16 %v351
    %v455 = vunpack.c.l.b16 %v352
    %v456 = vunpack.c.h.b16 %v352
    %v457 = vunpack.c.l.b16 %v353
    %v458 = vunpack.c.h.b16 %v353
    %v459 = vunpack.c.l.b16 %v354
    %v460 = vunpack.c.h.b16 %v354
    %v461 = vunpack.c.l.b16 %v355
    %v462 = vunpack.c.h.b16 %v355
    %v463 = vunpack.c.l.b16 %v356
    %v464 = vunpack.c.h.b16 %v356
    %v465 = vunpack.c.l.b16 %v357
    %v466 = vunpack.c.h.b16 %v357
    %v467 = vpack.c.b16 %v405, %v403
    %v468 = vpack.c.b16 %v406, %v404
    %v469 = vpack.c.b16 %v409, %v407
    %v470 = vpack.c.b16 %v410, %v408
    %v471 = vpack.c.b16 %v413, %v411
    %v472 = vpack.c.b16 %v414, %v412
    %v473 = vpack.c.b16 %v417, %v415
    %v474 = vpack.c.b16 %v418, %v416
    %v475 = vpack.c.b16 %v421, %v419
    %v476 = vpack.c.b16 %v422, %v420
    %v477 = vpack.c.b16 %v425, %v423
    %v478 = vpack.c.b16 %v426, %v424
    %v479 = vpack.c.b16 %v429, %v427
    %v480 = vpack.c.b16 %v430, %v428
    %v481 = vpack.c.b16 %v433, %v431
    %v482 = vpack.c.b16 %v434, %v432
    %v483 = vpack.c.b16 %v437, %v435
    %v484 = vpack.c.b16 %v438, %v436
    %v485 = vpack.c.b16 %v441, %v439
    %v486 = vpack.c.b16 %v442, %v440
    %v487 = vpack.c.b16 %v445, %v443
    %v488 = vpack.c.b16 %v446, %v444
    %v489 = vpack.c.b16 %v449, %v447
    %v490 = vpack.c.b16 %v450, %v448
    %v491 = vpack.c.b16 %v453, %v451
    %v492 = vpack.c.b16 %v454, %v452
    %v493 = vpack.c.b16 %v457, %v455
    %v494 = vpack.c.b16 %v458, %v456
    %v495 = vpack.c.b16 %v461, %v459
    %v496 = vpack.c.b16 %v462, %v460
    %v497 = vpack.c.b16 %v465, %v463
    %v498 = vpack.c.b16 %v466, %v464
    %531 = vmatpush.bf16.msra.mxu0 %v481
    %532 = vmatpush.bf16.msra.mxu0 %v479
    %533 = vmatpush.bf16.msra.mxu0 %v477
    %534 = vmatpush.bf16.msra.mxu0 %v475
    %535 = vmatpush.bf16.msra.mxu0 %v473
    %536 = vmatpush.bf16.msra.mxu0 %v471
    %537 = vmatpush.bf16.msra.mxu0 %v469
    %538 = vmatpush.bf16.msra.mxu0 %v467
    %539 = vmatmul.bf16.gmra.mxu0 %v367
    %v540 = vpop.f32.mrf.mxu0
    %v541 = vadd.f32 %v360, %v540
    %v542 = vpop.f32.mrf.mxu0
    %543 = vdwg.mxu0
    %544 = vmatpush.bf16.msra.mxu0 %v497
    %545 = vmatpush.bf16.msra.mxu0 %v495
    %546 = vmatpush.bf16.msra.mxu0 %v493
    %547 = vmatpush.bf16.msra.mxu0 %v491
    %548 = vmatpush.bf16.msra.mxu0 %v489
    %549 = vmatpush.bf16.msra.mxu0 %v487
    %550 = vmatpush.bf16.msra.mxu0 %v485
    %551 = vmatpush.bf16.msra.mxu0 %v483
    %552 = vmatmul.bf16.gmra.mxu0 %v368
    %v553 = vpop.f32.mrf.mxu0
    %v554 = vadd.f32 %v541, %v553
    %v555 = vpop.f32.mrf.mxu0
    %556 = vdwg.mxu0
    %557 = vmatpush.bf16.msra.mxu0 %v482
    %558 = vmatpush.bf16.msra.mxu0 %v480
    %559 = vmatpush.bf16.msra.mxu0 %v478
    %560 = vmatpush.bf16.msra.mxu0 %v476
    %561 = vmatpush.bf16.msra.mxu0 %v474
    %562 = vmatpush.bf16.msra.mxu0 %v472
    %563 = vmatpush.bf16.msra.mxu0 %v470
    %564 = vmatpush.bf16.msra.mxu0 %v468
    %565 = vmatmul.bf16.gmra.mxu0 %v367
    %v566 = vpop.f32.mrf.mxu0
    %v567 = vadd.f32 %v361, %v566
    %v568 = vpop.f32.mrf.mxu0
    %569 = vdwg.mxu0
    %570 = vmatpush.bf16.msra.mxu0 %v498
    %571 = vmatpush.bf16.msra.mxu0 %v496
    %572 = vmatpush.bf16.msra.mxu0 %v494
    %573 = vmatpush.bf16.msra.mxu0 %v492
    %574 = vmatpush.bf16.msra.mxu0 %v490
    %575 = vmatpush.bf16.msra.mxu0 %v488
    %576 = vmatpush.bf16.msra.mxu0 %v486
    %577 = vmatpush.bf16.msra.mxu0 %v484
    %578 = vmatmul.bf16.gmra.mxu0 %v368
    %v579 = vpop.f32.mrf.mxu0
    %v580 = vadd.f32 %v567, %v579
    %v581 = vpop.f32.mrf.mxu0
    %582 = vdwg.mxu0
    %v583 = vmax.f32 %v554, 0.0
    %v584 = vmax.f32 %v580, 0.0
    %v585 = vld [vmem:[#allocation7] sm:$0xff]
    %v586 = vld [vmem:[#allocation7 + $0x8] sm:$0xff]
    %v587 = vld [vmem:[#allocation7 + $0x10] sm:$0xff]
    %v588 = vld [vmem:[#allocation7 + $0x18] sm:$0xff]
    %v589 = vld [vmem:[#allocation7 + $0x20] sm:$0xff]
    %v590 = vld [vmem:[#allocation7 + $0x28] sm:$0xff]
    %v591 = vld [vmem:[#allocation7 + $0x30] sm:$0xff]
    %v592 = vld [vmem:[#allocation7 + $0x38] sm:$0xff]
    %v593 = vld [vmem:[#allocation7 + $0x40] sm:$0xff]
    %v594 = vld [vmem:[#allocation7 + $0x48] sm:$0xff]
    %v595 = vld [vmem:[#allocation7 + $0x50] sm:$0xff]
    %v596 = vld [vmem:[#allocation7 + $0x58] sm:$0xff]
    %v597 = vld [vmem:[#allocation7 + $0x60] sm:$0xff]
    %v598 = vld [vmem:[#allocation7 + $0x68] sm:$0xff]
    %v599 = vld [vmem:[#allocation7 + $0x70] sm:$0xff]
    %v600 = vld [vmem:[#allocation7 + $0x78] sm:$0xff]
    %v601 = vld [vmem:[#allocation7 + $0x80] sm:$0xff]
    %v602 = vld [vmem:[#allocation7 + $0x88] sm:$0xff]
    %v603 = vld [vmem:[#allocation7 + $0x90] sm:$0xff]
    %v604 = vld [vmem:[#allocation7 + $0x98] sm:$0xff]
    %v605 = vld [vmem:[#allocation7 + $0xa0] sm:$0xff]
    %v606 = vld [vmem:[#allocation7 + $0xa8] sm:$0xff]
    %v607 = vld [vmem:[#allocation7 + $0xb0] sm:$0xff]
    %v608 = vld [vmem:[#allocation7 + $0xb8] sm:$0xff]
    %v609 = vld [vmem:[#allocation7 + $0xc0] sm:$0xff]
    %v610 = vld [vmem:[#allocation7 + $0xc8] sm:$0xff]
    %v611 = vld [vmem:[#allocation7 + $0xd0] sm:$0xff]
    %v612 = vld [vmem:[#allocation7 + $0xd8] sm:$0xff]
    %v613 = vld [vmem:[#allocation7 + $0xe0] sm:$0xff]
    %v614 = vld [vmem:[#allocation7 + $0xe8] sm:$0xff]
    %v615 = vld [vmem:[#allocation7 + $0xf0] sm:$0xff]
    %v616 = vld [vmem:[#allocation7 + $0xf8] sm:$0xff]
    %v617 = vld [vmem:[%s8] sm:$0x3]
    %v619 = vperm.slane %v617, 0
    %v620 = vperm.slane %v617, 1
    %v624 = vunpack.c.l.b16 %v325
    %v625 = vunpack.c.h.b16 %v325
    %v626 = vpack.c.b16 %v624, %v624
    %v627 = vpack.c.b16 %v625, %v625
    %v662 = vunpack.c.l.b16 %v585
    %v663 = vunpack.c.h.b16 %v585
    %v664 = vunpack.c.l.b16 %v586
    %v665 = vunpack.c.h.b16 %v586
    %v666 = vunpack.c.l.b16 %v587
    %v667 = vunpack.c.h.b16 %v587
    %v668 = vunpack.c.l.b16 %v588
    %v669 = vunpack.c.h.b16 %v588
    %v670 = vunpack.c.l.b16 %v589
    %v671 = vunpack.c.h.b16 %v589
    %v672 = vunpack.c.l.b16 %v590
    %v673 = vunpack.c.h.b16 %v590
    %v674 = vunpack.c.l.b16 %v591
    %v675 = vunpack.c.h.b16 %v591
    %v676 = vunpack.c.l.b16 %v592
    %v677 = vunpack.c.h.b16 %v592
    %v678 = vunpack.c.l.b16 %v593
    %v679 = vunpack.c.h.b16 %v593
    %v680 = vunpack.c.l.b16 %v594
    %v681 = vunpack.c.h.b16 %v594
    %v682 = vunpack.c.l.b16 %v595
    %v683 = vunpack.c.h.b16 %v595
    %v684 = vunpack.c.l.b16 %v596
    %v685 = vunpack.c.h.b16 %v596
    %v686 = vunpack.c.l.b16 %v597
    %v687 = vunpack.c.h.b16 %v597
    %v688 = vunpack.c.l.b16 %v598
    %v689 = vunpack.c.h.b16 %v598
    %v690 = vunpack.c.l.b16 %v599
    %v691 = vunpack.c.h.b16 %v599
    %v692 = vunpack.c.l.b16 %v600
    %v693 = vunpack.c.h.b16 %v600
    %v694 = vunpack.c.l.b16 %v601
    %v695 = vunpack.c.h.b16 %v601
    %v696 = vunpack.c.l.b16 %v602
    %v697 = vunpack.c.h.b16 %v602
    %v698 = vunpack.c.l.b16 %v603
    %v699 = vunpack.c.h.b16 %v603
    %v700 = vunpack.c.l.b16 %v604
    %v701 = vunpack.c.h.b16 %v604
    %v702 = vunpack.c.l.b16 %v605
    %v703 = vunpack.c.h.b16 %v605
    %v704 = vunpack.c.l.b16 %v606
    %v705 = vunpack.c.h.b16 %v606
    %v706 = vunpack.c.l.b16 %v607
    %v707 = vunpack.c.h.b16 %v607
    %v708 = vunpack.c.l.b16 %v608
    %v709 = vunpack.c.h.b16 %v608
    %v710 = vunpack.c.l.b16 %v609
    %v711 = vunpack.c.h.b16 %v609
    %v712 = vunpack.c.l.b16 %v610
    %v713 = vunpack.c.h.b16 %v610
    %v714 = vunpack.c.l.b16 %v611
    %v715 = vunpack.c.h.b16 %v611
    %v716 = vunpack.c.l.b16 %v612
    %v717 = vunpack.c.h.b16 %v612
    %v718 = vunpack.c.l.b16 %v613
    %v719 = vunpack.c.h.b16 %v613
    %v720 = vunpack.c.l.b16 %v614
    %v721 = vunpack.c.h.b16 %v614
    %v722 = vunpack.c.l.b16 %v615
    %v723 = vunpack.c.h.b16 %v615
    %v724 = vunpack.c.l.b16 %v616
    %v725 = vunpack.c.h.b16 %v616
    %v726 = vpack.c.b16 %v664, %v662
    %v727 = vpack.c.b16 %v665, %v663
    %v728 = vpack.c.b16 %v668, %v666
    %v729 = vpack.c.b16 %v669, %v667
    %v730 = vpack.c.b16 %v672, %v670
    %v731 = vpack.c.b16 %v673, %v671
    %v732 = vpack.c.b16 %v676, %v674
    %v733 = vpack.c.b16 %v677, %v675
    %v734 = vpack.c.b16 %v680, %v678
    %v735 = vpack.c.b16 %v681, %v679
    %v736 = vpack.c.b16 %v684, %v682
    %v737 = vpack.c.b16 %v685, %v683
    %v738 = vpack.c.b16 %v688, %v686
    %v739 = vpack.c.b16 %v689, %v687
    %v740 = vpack.c.b16 %v692, %v690
    %v741 = vpack.c.b16 %v693, %v691
    %v742 = vpack.c.b16 %v696, %v694
    %v743 = vpack.c.b16 %v697, %v695
    %v744 = vpack.c.b16 %v700, %v698
    %v745 = vpack.c.b16 %v701, %v699
    %v746 = vpack.c.b16 %v704, %v702
    %v747 = vpack.c.b16 %v705, %v703
    %v748 = vpack.c.b16 %v708, %v706
    %v749 = vpack.c.b16 %v709, %v707
    %v750 = vpack.c.b16 %v712, %v710
    %v751 = vpack.c.b16 %v713, %v711
    %v752 = vpack.c.b16 %v716, %v714
    %v753 = vpack.c.b16 %v717, %v715
    %v754 = vpack.c.b16 %v720, %v718
    %v755 = vpack.c.b16 %v721, %v719
    %v756 = vpack.c.b16 %v724, %v722
    %v757 = vpack.c.b16 %v725, %v723
    %790 = vmatpush.bf16.msra.mxu0 %v740
    %791 = vmatpush.bf16.msra.mxu0 %v738
    %792 = vmatpush.bf16.msra.mxu0 %v736
    %793 = vmatpush.bf16.msra.mxu0 %v734
    %794 = vmatpush.bf16.msra.mxu0 %v732
    %795 = vmatpush.bf16.msra.mxu0 %v730
    %796 = vmatpush.bf16.msra.mxu0 %v728
    %797 = vmatpush.bf16.msra.mxu0 %v726
    %798 = vmatmul.bf16.gmra.mxu0 %v626
    %v799 = vpop.f32.mrf.mxu0
    %v800 = vadd.f32 %v619, %v799
    %v801 = vpop.f32.mrf.mxu0
    %802 = vdwg.mxu0
    %803 = vmatpush.bf16.msra.mxu0 %v756
    %804 = vmatpush.bf16.msra.mxu0 %v754
    %805 = vmatpush.bf16.msra.mxu0 %v752
    %806 = vmatpush.bf16.msra.mxu0 %v750
    %807 = vmatpush.bf16.msra.mxu0 %v748
    %808 = vmatpush.bf16.msra.mxu0 %v746
    %809 = vmatpush.bf16.msra.mxu0 %v744
    %810 = vmatpush.bf16.msra.mxu0 %v742
    %811 = vmatmul.bf16.gmra.mxu0 %v627
    %v812 = vpop.f32.mrf.mxu0
    %v813 = vadd.f32 %v800, %v812
    %v814 = vpop.f32.mrf.mxu0
    %815 = vdwg.mxu0
    %816 = vmatpush.bf16.msra.mxu0 %v741
    %817 = vmatpush.bf16.msra.mxu0 %v739
    %818 = vmatpush.bf16.msra.mxu0 %v737
    %819 = vmatpush.bf16.msra.mxu0 %v735
    %820 = vmatpush.bf16.msra.mxu0 %v733
    %821 = vmatpush.bf16.msra.mxu0 %v731
    %822 = vmatpush.bf16.msra.mxu0 %v729
    %823 = vmatpush.bf16.msra.mxu0 %v727
    %824 = vmatmul.bf16.gmra.mxu0 %v626
    %v825 = vpop.f32.mrf.mxu0
    %v826 = vadd.f32 %v620, %v825
    %v827 = vpop.f32.mrf.mxu0
    %828 = vdwg.mxu0
    %829 = vmatpush.bf16.msra.mxu0 %v757
    %830 = vmatpush.bf16.msra.mxu0 %v755
    %831 = vmatpush.bf16.msra.mxu0 %v753
    %832 = vmatpush.bf16.msra.mxu0 %v751
    %833 = vmatpush.bf16.msra.mxu0 %v749
    %834 = vmatpush.bf16.msra.mxu0 %v747
    %835 = vmatpush.bf16.msra.mxu0 %v745
    %836 = vmatpush.bf16.msra.mxu0 %v743
    %837 = vmatmul.bf16.gmra.mxu0 %v627
    %v838 = vpop.f32.mrf.mxu0
    %v839 = vadd.f32 %v826, %v838
    %v840 = vpop.f32.mrf.mxu0
    %841 = vdwg.mxu0
    %v842 = vmax.f32 %v813, 0.0
    %v843 = vmax.f32 %v839, 0.0
    %v844 = vld [vmem:[%s9] sm:$0x3]
    %v846 = vperm.slane %v844, 0
    %v847 = vperm.slane %v844, 1
    %v850 = vmul.f32 %v583, %v846
    %v851 = vmul.f32 %v584, %v847
    %v852 = vadd.f32 %v850, %v851
    %853 = vadd.xlane.f32.xlu0 %v852
    %v854 = vpop.xlane.xlu0 %853
    %v855 = vld [vmem:[%s10] sm:$0x3]
    %v857 = vperm.slane %v855, 0
    %v858 = vperm.slane %v855, 1
    %v861 = vmul.f32 %v842, %v857
    %v862 = vmul.f32 %v843, %v858
    %v863 = vadd.f32 %v861, %v862
    %864 = vadd.xlane.f32.xlu0 %v863
    %v865 = vpop.xlane.xlu0 %864
    %v866 = vlaneseq
    %v867 = vand.u32 %v866, 127
    %vm868 = vcmp.eq.s32.totalorder %v867, 0
    %v869 = vsel %vm868, %v854, %v865
    %v870 = vld [vmem:[%s11] sm:$0x1]
    %v872 = vperm.slane %v870, 0
    %v874 = vadd.f32 %v869, %v872
    %vm875 = vcmask 15360
    %876 = vst.msk [vmem:[%s12] sm:$0xff] %vm875, %v874
    // Predicated region
    $region66: #{tpu_custom_call.1} parent=1 // pred_check
      _
    $region67: #{tpu_custom_call.1} parent=1 // pred_check_branch
      %878 = sbr.rel (0) target = $region69
    $region68: #{tpu_custom_call.1} parent=1 // pred_region
      _
    $region69: #{tpu_custom_call.1} parent=1 // pred_fallthru
      _
    // Predicated region
    $region70: #{tpu_custom_call.1} parent=1 // pred_check
      _
    $region71: #{tpu_custom_call.1} parent=1 // pred_check_branch
      %880 = sbr.rel (0) target = $region73
    $region72: #{tpu_custom_call.1} parent=1 // pred_region
      _
    $region73: #{tpu_custom_call.1} parent=1 // pred_fallthru
      _
    %881 = vsyncpa [#allocation3], 1
    %882 = vsyncpa [#allocation5], 1
    %883 = vsyncpa [#allocation8], 1

</llo_original>
